<compile_context>
chip_gen: v7x
topology: tpu7x:2x2x1
jax: 0.10.0
libtpu: 0.0.40
codegen_flags: <defaults>
</compile_context>

<pallas_src>
import functools

import numpy as np
import jax
import jax.numpy as jnp
from jax import lax
from jax.experimental import pallas as pl
from jax.experimental.pallas import tpu as pltpu

# ----------------------------------------------------------------------------
# Synthetic skeleton topology / hyper-parameters (what Encoder.__init__ builds)
# ----------------------------------------------------------------------------
PARENTS = [
    [-1, 0, 1, 2, 3, 4, 5, 6],  # level 0 (original skeleton): 8 joints
    [-1, 0, 1, 2],              # level 1: 4 joints
    [-1, 0],                    # level 2: 2 joints
    [-1],                       # level 3 (latent): 1 joint
]
POOLING_LISTS = [
    [[0, 1], [2, 3], [4, 5], [6, 7]],  # level0 <- level1
    [[0, 1], [2, 3]],                  # level1 <- level2
    [[0, 1]],                          # level2 <- level3
]
PARAM = {"kernel_size_temporal_dim": 3, "stride_encoder_conv": 2, "neighbor_distance": 1}
NUMBER_LAYERS = 3
CHANNEL_SIZE = [8, 16, 32, 64]  # channels-per-joint at each resolution level


def find_neighbor(parents, dist):
    """Joints within graph distance `dist` on the skeleton tree."""
    n = len(parents)
    adj = [[] for _ in range(n)]
    for j, p in enumerate(parents):
        if p >= 0:
            adj[j].append(p)
            adj[p].append(j)
    out = []
    for j in range(n):
        seen = {j}
        frontier = [j]
        for _ in range(dist):
            nxt = []
            for u in frontier:
                for v in adj[u]:
                    if v not in seen:
                        seen.add(v)
                        nxt.append(v)
            frontier = nxt
        out.append(sorted(seen))
    return out, None


def upsample_pad_matrix(t_in, pad):
    """numpy (t_in, 2*t_in + 2*pad) matrix implementing nn.Upsample(scale=2,
    'linear', align_corners=False) followed by zero padding of `pad` per side."""
    t_up = 2 * t_in
    m = np.zeros((t_in, t_up + 2 * pad), dtype=np.float32)
    for j in range(t_up):
        src = max((j + 0.5) / 2.0 - 0.5, 0.0)
        i0 = int(np.floor(src))
        i1 = min(i0 + 1, t_in - 1)
        w1 = src - i0
        m[i0, pad + j] += 1.0 - w1
        m[i1, pad + j] += w1
    return m


# ----------------------------------------------------------------------------
# Parameter construction (deterministic, synthetic)
# ----------------------------------------------------------------------------
def build_decoder_params(key):
    layers = []
    K = PARAM["kernel_size_temporal_dim"]
    pad = (K - 1) // 2
    for i in range(NUMBER_LAYERS):
        lvl = NUMBER_LAYERS - i - 1  # 2, 1, 0
        neighbor_list, _ = find_neighbor(PARENTS[lvl], PARAM["neighbor_distance"])
        J = len(neighbor_list)
        in_cpj = CHANNEL_SIZE[NUMBER_LAYERS - i]   # 64, 32, 16
        out_cpj = in_cpj // 2                      # 32, 16, 8
        Cin, Cout = in_cpj * J, out_cpj * J
        in_off = 3 * CHANNEL_SIZE[lvl] // CHANNEL_SIZE[0]  # 12, 6, 3

        # SkeletonUnpool: 0/1 matrix duplicating per-edge channel blocks -> gather idx.
        plist = POOLING_LISTS[lvl]
        out_edges = sum(len(p) for p in plist)
        unpool_idx = np.zeros(out_edges * in_cpj, np.int32)
        for src_edge, group in enumerate(plist):
            for dst_edge in group:
                unpool_idx[dst_edge * in_cpj:(dst_edge + 1) * in_cpj] = np.arange(
                    src_edge * in_cpj, (src_edge + 1) * in_cpj)

        # SkeletonConv mask + offset-encoder (SkeletonLinear) mask.
        mask = np.zeros((Cout, Cin, K), np.float32)
        lin_mask = np.zeros((Cout, in_off * J), np.float32)
        for j, nb in enumerate(neighbor_list):
            cols = np.concatenate([np.arange(k * in_cpj, (k + 1) * in_cpj) for k in nb])
            mask[j * out_cpj:(j + 1) * out_cpj, cols.reshape(-1, 1), :] = 1.0
            lcols = np.concatenate([np.arange(k * in_off, (k + 1) * in_off) for k in nb])
            lin_mask[j * out_cpj:(j + 1) * out_cpj, lcols] = 1.0

        key, k1, k2, k3, k4 = jax.random.split(key, 5)
        w = jax.random.normal(k1, (Cout, Cin, K), jnp.float32) / np.sqrt(Cin * K)
        w = w * jnp.asarray(mask)
        b = 0.05 * jax.random.normal(k2, (Cout,), jnp.float32)
        lin_w = jax.random.normal(k3, (Cout, in_off * J), jnp.float32) / np.sqrt(in_off * J)
        lin_w = lin_w * jnp.asarray(lin_mask)
        lin_b = 0.05 * jax.random.normal(k4, (Cout,), jnp.float32)

        layers.append(dict(
            J=J, Cin=Cin, Cout=Cout, K=K, pad=pad,
            Cin_pre=len(plist) * in_cpj,          # channel count BEFORE the unpool
            unpool_idx=jnp.asarray(unpool_idx),
            conv_w=jnp.transpose(w, (2, 0, 1)),   # stored as (K, Cout, Cin)
            conv_b=b, lin_w=lin_w, lin_b=lin_b,
            apply_act=(i != NUMBER_LAYERS - 1),
        ))
    return layers, key


def make_kernel_params(layers):
    """Kernel-side parameters:
       - SkeletonUnpool folded into the conv weights (w' = w @ U) and the K taps
         stacked horizontally -> one (Cout, K*Cin_pre) matrix per layer,
       - per-layer offset encoders packed into one block-diagonal matrix
         (pre-scaled by 1/100) + folded constant bias,
       - 0/1 selection matrix for the per-joint dual-quaternion real-part norm."""
    K = layers[0]["K"]
    w_stacks, lws, cbs = [], [], []
    for lp in layers:
        U = np.zeros((lp["Cin"], lp["Cin_pre"]), np.float32)
        U[np.arange(lp["Cin"]), np.asarray(lp["unpool_idx"])] = 1.0
        w = np.asarray(lp["conv_w"])                                # (K, Cout, Cin_post)
        w_fold = np.concatenate([w[k] @ U for k in range(K)], axis=1)
        w_stacks.append(w_fold)                                     # (Cout, K*Cin_pre)
        lws.append(np.asarray(lp["lin_w"]) / 100.0)
        cbs.append(np.asarray(lp["conv_b"]) + np.asarray(lp["lin_b"]) / 100.0)
    w_stack = np.stack(w_stacks, 0)                                 # (L, Cout, K*Cin_pre)

    rows = sum(w.shape[0] for w in lws)
    cols = sum(w.shape[1] for w in lws)
    LW = np.zeros((rows, cols), np.float32)
    r = c = 0
    for w in lws:
        LW[r:r + w.shape[0], c:c + w.shape[1]] = w
        r += w.shape[0]
        c += w.shape[1]
    CB = np.concatenate(cbs).reshape(-1, 1)

    cout = w_stack.shape[1]
    sel = np.zeros((cout, cout), np.float32)
    for ch in range(cout):
        j = ch // 8
        sel[ch, j * 8:j * 8 + 4] = 1.0

    return dict(
        w_stack=jnp.asarray(w_stack, jnp.float32),    # f32: MXU is far from binding
        lw=jnp.asarray(LW, jnp.float32),
        cb=jnp.asarray(CB, jnp.float32),
        sel=jnp.asarray(sel, jnp.float32),
    )


# ----------------------------------------------------------------------------
# Fused Pallas kernel (whole decoder; batch folded into the lane/N axis)
# ----------------------------------------------------------------------------
def _decoder_kernel(x_ref, off_ref, w_ref, *rest, L, K, B, t0):
    m_refs = rest[:L]
    lw_ref, cb_ref, stats_ref, sel_ref, o_ref = rest[L:]

    cout = w_ref.shape[1]

    # Dynamic per-batch bias of all L layers in one block-diagonal matmul:
    #   bias = blockdiag(lin_w/100) @ offsets + (conv_b + lin_b/100)  -> (L*Cout, B)
    bias_all = jnp.dot(lw_ref[...], off_ref[...],
                       preferred_element_type=jnp.float32) + cb_ref[...]

    x_cur = x_ref[...]                                  # (Cin0, B*t0), f32
    t = t0
    acc = None
    for i in range(L):
        t_out = 2 * t
        bt = B * t_out
        # X-hat = [x @ M_0 ; ... ; x @ M_{K-1}]  -> (K*Cin_pre, B*t_out), built
        # entirely in vregs (64-row pieces are sublane-tile aligned, so the
        # concatenate is layout-free; no VMEM scratch, no masked partial stores).
        # M_k are host-precomputed block-diagonal (over batch) shifted
        # upsample(+pad) matrices, so there is no unaligned lane slicing here.
        xhat = jnp.concatenate(
            [jnp.dot(x_cur, m_refs[i][k], preferred_element_type=jnp.float32)
             for k in range(K)], axis=0)
        # Folded-unpool conv, all K taps in a single wide MXU matmul.
        acc = jnp.dot(w_ref[i], xhat, preferred_element_type=jnp.float32)  # (Cout, bt)

        # Per-batch bias broadcast across that batch's time block (VPU masks).
        bias_i = bias_all[i * cout:(i + 1) * cout, :]                      # (Cout, B)
        col = lax.broadcasted_iota(jnp.int32, (cout, bt), 1)
        bias_bd = jnp.zeros((cout, bt), jnp.float32)
        for b in range(B):
            in_b = jnp.logical_and(col >= b * t_out, col < (b + 1) * t_out)
            bias_bd = jnp.where(in_b, bias_i[:, b:b + 1], bias_bd)
        acc = acc + bias_bd

        if i != L - 1:
            acc = jnp.where(acc >= 0, acc, 0.2 * acc)      # LeakyReLU(0.2), f32 VPU
        x_cur = acc
        t = t_out

    # Post-processing in f32: de-normalize, dual-quaternion normalize, re-normalize.
    std, mean, inv_std = stats_ref[0], stats_ref[1], stats_ref[2]   # (Cout, 1) each
    y = acc * std + mean
    # per-joint sum of squared real components, broadcast to all 8 channels of the
    # joint via a 0/1 selection matmul (avoids in-kernel reshapes / sublane reduces)
    sumsq = jnp.dot(sel_ref[...], y * y, preferred_element_type=jnp.float32)
    rs = lax.rsqrt(jnp.maximum(sumsq, 1e-12))
    o_ref[...] = (y * rs - mean) * inv_std                # (Cout, B*t_fin): 128 lanes


def decoder_forward(kparams, x, offsets, mean_dqs, std_dqs):
    """Decoder.forward as a single fused pallas_call (one grid step)."""
    B, cin0, t0 = x.shape
    w_stack = kparams["w_stack"]                   # (L, Cout, K*Cin_pre)
    L, cout, kc = w_stack.shape
    K = kc // cin0
    pad = (K - 1) // 2

    # Host-precomputed block-diagonal (over batch) shifted upsample(+pad) matrices.
    m_shift = []
    t = t0
    for _ in range(L):
        m = upsample_pad_matrix(t, pad)                             # (t, 2t + 2*pad)
        taps = np.stack([m[:, k:k + 2 * t] for k in range(K)], 0)   # (K, t, 2t)
        bd = np.zeros((K, B * t, B * 2 * t), np.float32)
        for b in range(B):
            bd[:, b * t:(b + 1) * t, b * 2 * t:(b + 1) * 2 * t] = taps
        m_shift.append(jnp.asarray(bd, jnp.float32))
        t *= 2
    t_fin = t                                                       # t0 * 2**L

    # Fold batch into the lane axis: x -> (Cin0, B*t0); offsets -> (sum_off, B)
    # (layer i uses offsets[L-1-i]).
    x2 = jnp.transpose(x, (1, 0, 2)).reshape(cin0, B * t0).astype(jnp.float32)
    off2 = jnp.concatenate(
        [offsets[L - 1 - i].reshape(B, -1) for i in range(L)], axis=1
    ).astype(jnp.float32).T                                         # (sum_off, B)
    stats = jnp.stack(
        [std_dqs, mean_dqs, 1.0 / std_dqs], axis=0).astype(jnp.float32)[..., None]  # (3, Cout, 1)

    kernel = functools.partial(_decoder_kernel, L=L, K=K, B=B, t0=t0)
    in_specs = ([
        pl.BlockSpec(x2.shape, lambda i: (0, 0)),
        pl.BlockSpec(off2.shape, lambda i: (0, 0)),
        pl.BlockSpec(w_stack.shape, lambda i: (0, 0, 0)),
    ] + [pl.BlockSpec(m.shape, lambda i: (0, 0, 0)) for m in m_shift] + [
        pl.BlockSpec(kparams["lw"].shape, lambda i: (0, 0)),
        pl.BlockSpec(kparams["cb"].shape, lambda i: (0, 0)),
        pl.BlockSpec(stats.shape, lambda i: (0, 0, 0)),
        pl.BlockSpec(kparams["sel"].shape, lambda i: (0, 0)),
    ])

    out_bd = pl.pallas_call(
        kernel,
        out_shape=jax.ShapeDtypeStruct((cout, B * t_fin), jnp.float32),
        grid_spec=pltpu.PrefetchScalarGridSpec(
            num_scalar_prefetch=0,
            grid=(1,),                              # whole decoder in one grid step
            in_specs=in_specs,
            out_specs=pl.BlockSpec((cout, B * t_fin), lambda i: (0, 0)),
        ),
        compiler_params=pltpu.CompilerParams(
            dimension_semantics=("arbitrary",)),
    )(x2, off2, w_stack, *m_shift,
      kparams["lw"], kparams["cb"], stats, kparams["sel"])

    # Un-fold the batch: (Cout, B*t_fin) -> (B, Cout, t_fin).  Tiny layout op.
    return jnp.transpose(out_bd.reshape(cout, B, t_fin), (1, 0, 2))


# ----------------------------------------------------------------------------
# Pure-JAX reference (mirrors the PyTorch op order exactly) for validation
# ----------------------------------------------------------------------------
def reference_forward(layers, x, offsets, mean_dqs, std_dqs):
    B = x.shape[0]
    for i, lp in enumerate(layers):
        off = offsets[NUMBER_LAYERS - i - 1].reshape(B, -1)
        off_res = off @ lp["lin_w"].T + lp["lin_b"]
        # Upsample(scale=2, linear, align_corners=False)
        M = jnp.asarray(upsample_pad_matrix(x.shape[2], 0))
        xu = jnp.einsum("bct,tp->bcp", x, M)
        # SkeletonUnpool
        xu = xu[:, lp["unpool_idx"], :]
        # masked conv1d, stride 1, padding pad
        pad = lp["pad"]
        xp = jnp.pad(xu, ((0, 0), (0, 0), (pad, pad)))
        Tout = xu.shape[2]
        y = jnp.zeros((B, lp["Cout"], Tout), jnp.float32)
        for k in range(lp["K"]):
            y = y + jnp.einsum("oc,bct->bot", lp["conv_w"][k], xp[:, :, k:k + Tout])
        y = y + lp["conv_b"][None, :, None] + (off_res / 100.0)[:, :, None]
        if lp["apply_act"]:
            y = jnp.where(y >= 0, y, 0.2 * y)
        x = y
    y = x * std_dqs[None, :, None] + mean_dqs[None, :, None]
    B, C, T = y.shape
    y4 = y.reshape(B, C // 8, 8, T)
    nrm = jnp.sqrt(jnp.sum(y4[:, :, :4, :] ** 2, axis=2, keepdims=True))
    y = (y4 / nrm).reshape(B, C, T)
    return (y - mean_dqs[None, :, None]) / std_dqs[None, :, None]


# ----------------------------------------------------------------------------
if __name__ == "__main__":
    key = jax.random.PRNGKey(0)
    layers, key = build_decoder_params(key)
    kparams = make_kernel_params(layers)

    B, T0 = 2, 8
    Cin0 = len(POOLING_LISTS[2]) * CHANNEL_SIZE[3]   # latent channels: 1 joint * 64
    J0 = len(PARENTS[0])

    key, kx, ko0, ko1, ko2, km, ks = jax.random.split(key, 7)
    x = 0.1 * jax.random.normal(kx, (B, Cin0, T0), jnp.float32)
    offsets = [
        jax.random.normal(ko0, (B, len(PARENTS[0]), 3), jnp.float32),
        jax.random.normal(ko1, (B, len(PARENTS[1]), 6), jnp.float32),
        jax.random.normal(ko2, (B, len(PARENTS[2]), 12), jnp.float32),
    ]
    mean_dqs = (jnp.tile(jnp.asarray([1., 0., 0., 0., 0., 0., 0., 0.], jnp.float32), (J0,))
                + 0.01 * jax.random.normal(km, (J0 * 8,), jnp.float32))
    std_dqs = 0.5 + 0.1 * jax.random.uniform(ks, (J0 * 8,), jnp.float32)

    fwd = jax.jit(decoder_forward)
    out = fwd(kparams, x, offsets, mean_dqs, std_dqs)
    out = jax.block_until_ready(out)

    assert out.shape == (B, J0 * 8, T0 * 8), out.shape
    assert bool(jnp.all(jnp.isfinite(out)))
    ref = reference_forward(layers, x, offsets, mean_dqs, std_dqs)
    err = float(jnp.max(jnp.abs(out - ref)))
    assert bool(jnp.allclose(out, ref, rtol=5e-2, atol=5e-2)), err

    print("KERNEL_OK")
</pallas_src>

<mosaic_0001>
module attributes {stable_mosaic.version = 11 : i64} {
  func.func @_decoder_kernel(%arg0: i32, %arg1: memref<64x16xf32, #tpu.memory_space<vmem>>, %arg2: memref<72x2xf32, #tpu.memory_space<vmem>>, %arg3: memref<3x64x192xf32, #tpu.memory_space<vmem>>, %arg4: memref<3x16x32xf32, #tpu.memory_space<vmem>>, %arg5: memref<3x32x64xf32, #tpu.memory_space<vmem>>, %arg6: memref<3x64x128xf32, #tpu.memory_space<vmem>>, %arg7: memref<192x72xf32, #tpu.memory_space<vmem>>, %arg8: memref<192x1xf32, #tpu.memory_space<vmem>>, %arg9: memref<3x64x1xf32, #tpu.memory_space<vmem>>, %arg10: memref<64x64xf32, #tpu.memory_space<vmem>>, %arg11: memref<64x128xf32, #tpu.memory_space<vmem>>) attributes {dimension_semantics = [#tpu.dimension_semantics<arbitrary>], iteration_bounds = array<i64: 1>, scalar_prefetch = 0 : i64, scratch_operands = 0 : i64, tpu.core_type = #tpu.core_type<tc>, window_params = [{pipeline_mode = #tpu.pipeline_mode<synchronous>, transform_indices = @transform_0, window_bounds = array<i64: 64, 16>}, {pipeline_mode = #tpu.pipeline_mode<synchronous>, transform_indices = @transform_1, window_bounds = array<i64: 72, 2>}, {pipeline_mode = #tpu.pipeline_mode<synchronous>, transform_indices = @transform_2, window_bounds = array<i64: 3, 64, 192>}, {pipeline_mode = #tpu.pipeline_mode<synchronous>, transform_indices = @transform_3, window_bounds = array<i64: 3, 16, 32>}, {pipeline_mode = #tpu.pipeline_mode<synchronous>, transform_indices = @transform_4, window_bounds = array<i64: 3, 32, 64>}, {pipeline_mode = #tpu.pipeline_mode<synchronous>, transform_indices = @transform_5, window_bounds = array<i64: 3, 64, 128>}, {pipeline_mode = #tpu.pipeline_mode<synchronous>, transform_indices = @transform_6, window_bounds = array<i64: 192, 72>}, {pipeline_mode = #tpu.pipeline_mode<synchronous>, transform_indices = @transform_7, window_bounds = array<i64: 192, 1>}, {pipeline_mode = #tpu.pipeline_mode<synchronous>, transform_indices = @transform_8, window_bounds = array<i64: 3, 64, 1>}, {pipeline_mode = #tpu.pipeline_mode<synchronous>, transform_indices = @transform_9, window_bounds = array<i64: 64, 64>}, {pipeline_mode = #tpu.pipeline_mode<synchronous>, transform_indices = @transform_10, window_bounds = array<i64: 64, 128>}]} {
    %c0 = arith.constant 0 : index
    %c0_0 = arith.constant 0 : index
    %0 = vector.load %arg7[%c0, %c0_0] : memref<192x72xf32, #tpu.memory_space<vmem>>, vector<192x72xf32>
    %c0_1 = arith.constant 0 : index
    %c0_2 = arith.constant 0 : index
    %1 = vector.load %arg2[%c0_1, %c0_2] : memref<72x2xf32, #tpu.memory_space<vmem>>, vector<72x2xf32>
    %cst = arith.constant dense<0.000000e+00> : vector<192x2xf32>
    %2 = tpu.matmul %0, %1, %cst {dimension_numbers = #tpu.dot_dimension_numbers<[1], [0], [0], [1], [0, 0, 1, 1], [], []>} : vector<192x72xf32>, vector<72x2xf32>, vector<192x2xf32> -> vector<192x2xf32>
    %c0_3 = arith.constant 0 : index
    %c0_4 = arith.constant 0 : index
    %3 = vector.load %arg8[%c0_3, %c0_4] : memref<192x1xf32, #tpu.memory_space<vmem>>, vector<192x1xf32>
    %4 = vector.broadcast %3 : vector<192x1xf32> to vector<192x2xf32>
    %5 = arith.addf %2, %4 : vector<192x2xf32>
    %c0_5 = arith.constant 0 : index
    %c0_6 = arith.constant 0 : index
    %6 = vector.load %arg1[%c0_5, %c0_6] : memref<64x16xf32, #tpu.memory_space<vmem>>, vector<64x16xf32>
    %c0_7 = arith.constant 0 : index
    %c0_8 = arith.constant 0 : index
    %c0_9 = arith.constant 0 : index
    %7 = vector.load %arg4[%c0_7, %c0_8, %c0_9] : memref<3x16x32xf32, #tpu.memory_space<vmem>>, vector<1x16x32xf32>
    %8 = vector.shape_cast %7 : vector<1x16x32xf32> to vector<16x32xf32>
    %cst_10 = arith.constant dense<0.000000e+00> : vector<64x32xf32>
    %9 = tpu.matmul %6, %8, %cst_10 {dimension_numbers = #tpu.dot_dimension_numbers<[1], [0], [0], [1], [0, 0, 1, 1], [], []>} : vector<64x16xf32>, vector<16x32xf32>, vector<64x32xf32> -> vector<64x32xf32>
    %c1 = arith.constant 1 : index
    %c0_11 = arith.constant 0 : index
    %c0_12 = arith.constant 0 : index
    %10 = vector.load %arg4[%c1, %c0_11, %c0_12] : memref<3x16x32xf32, #tpu.memory_space<vmem>>, vector<1x16x32xf32>
    %11 = vector.shape_cast %10 : vector<1x16x32xf32> to vector<16x32xf32>
    %cst_13 = arith.constant dense<0.000000e+00> : vector<64x32xf32>
    %12 = tpu.matmul %6, %11, %cst_13 {dimension_numbers = #tpu.dot_dimension_numbers<[1], [0], [0], [1], [0, 0, 1, 1], [], []>} : vector<64x16xf32>, vector<16x32xf32>, vector<64x32xf32> -> vector<64x32xf32>
    %c2 = arith.constant 2 : index
    %c0_14 = arith.constant 0 : index
    %c0_15 = arith.constant 0 : index
    %13 = vector.load %arg4[%c2, %c0_14, %c0_15] : memref<3x16x32xf32, #tpu.memory_space<vmem>>, vector<1x16x32xf32>
    %14 = vector.shape_cast %13 : vector<1x16x32xf32> to vector<16x32xf32>
    %cst_16 = arith.constant dense<0.000000e+00> : vector<64x32xf32>
    %15 = tpu.matmul %6, %14, %cst_16 {dimension_numbers = #tpu.dot_dimension_numbers<[1], [0], [0], [1], [0, 0, 1, 1], [], []>} : vector<64x16xf32>, vector<16x32xf32>, vector<64x32xf32> -> vector<64x32xf32>
    %16 = tpu.concatenate %9, %12, %15 in 0 : vector<64x32xf32>, vector<64x32xf32>, vector<64x32xf32> -> vector<192x32xf32>
    %c0_17 = arith.constant 0 : index
    %c0_18 = arith.constant 0 : index
    %c0_19 = arith.constant 0 : index
    %17 = vector.load %arg3[%c0_17, %c0_18, %c0_19] : memref<3x64x192xf32, #tpu.memory_space<vmem>>, vector<1x64x192xf32>
    %18 = vector.shape_cast %17 : vector<1x64x192xf32> to vector<64x192xf32>
    %cst_20 = arith.constant dense<0.000000e+00> : vector<64x32xf32>
    %19 = tpu.matmul %18, %16, %cst_20 {dimension_numbers = #tpu.dot_dimension_numbers<[1], [0], [0], [1], [0, 0, 1, 1], [], []>} : vector<64x192xf32>, vector<192x32xf32>, vector<64x32xf32> -> vector<64x32xf32>
    %20 = vector.extract_strided_slice %5 {offsets = [0, 0], sizes = [64, 2], strides = [1, 1]} : vector<192x2xf32> to vector<64x2xf32>
    %21 = tpu.iota {dimensions = array<i32: 1>} : vector<64x32xi32>
    %cst_21 = arith.constant 0.000000e+00 : f32
    %22 = vector.broadcast %cst_21 : f32 to vector<64x32xf32>
    %c0_i32 = arith.constant 0 : i32
    %23 = vector.broadcast %c0_i32 : i32 to vector<64x32xi32>
    %24 = arith.cmpi sge, %21, %23 : vector<64x32xi32>
    %c16_i32 = arith.constant 16 : i32
    %25 = vector.broadcast %c16_i32 : i32 to vector<64x32xi32>
    %26 = arith.cmpi slt, %21, %25 : vector<64x32xi32>
    %27 = arith.andi %24, %26 : vector<64x32xi1>
    %28 = vector.extract_strided_slice %20 {offsets = [0, 0], sizes = [64, 1], strides = [1, 1]} : vector<64x2xf32> to vector<64x1xf32>
    %29 = vector.shape_cast %28 : vector<64x1xf32> to vector<64x1xf32>
    %30 = vector.broadcast %29 : vector<64x1xf32> to vector<64x32xf32>
    %31 = arith.select %27, %30, %22 : vector<64x32xi1>, vector<64x32xf32>
    %c16_i32_22 = arith.constant 16 : i32
    %32 = vector.broadcast %c16_i32_22 : i32 to vector<64x32xi32>
    %33 = arith.cmpi sge, %21, %32 : vector<64x32xi32>
    %c32_i32 = arith.constant 32 : i32
    %34 = vector.broadcast %c32_i32 : i32 to vector<64x32xi32>
    %35 = arith.cmpi slt, %21, %34 : vector<64x32xi32>
    %36 = arith.andi %33, %35 : vector<64x32xi1>
    %37 = vector.extract_strided_slice %20 {offsets = [0, 1], sizes = [64, 1], strides = [1, 1]} : vector<64x2xf32> to vector<64x1xf32>
    %38 = vector.shape_cast %37 : vector<64x1xf32> to vector<64x1xf32>
    %39 = vector.broadcast %38 : vector<64x1xf32> to vector<64x32xf32>
    %40 = arith.select %36, %39, %31 : vector<64x32xi1>, vector<64x32xf32>
    %41 = arith.addf %19, %40 : vector<64x32xf32>
    %cst_23 = arith.constant 0.000000e+00 : f32
    %42 = vector.broadcast %cst_23 : f32 to vector<64x32xf32>
    %43 = arith.cmpf oge, %41, %42 : vector<64x32xf32>
    %cst_24 = arith.constant 2.000000e-01 : f32
    %44 = vector.broadcast %cst_24 : f32 to vector<64x32xf32>
    %45 = arith.mulf %44, %41 : vector<64x32xf32>
    %46 = arith.select %43, %41, %45 : vector<64x32xi1>, vector<64x32xf32>
    %c0_25 = arith.constant 0 : index
    %c0_26 = arith.constant 0 : index
    %c0_27 = arith.constant 0 : index
    %47 = vector.load %arg5[%c0_25, %c0_26, %c0_27] : memref<3x32x64xf32, #tpu.memory_space<vmem>>, vector<1x32x64xf32>
    %48 = vector.shape_cast %47 : vector<1x32x64xf32> to vector<32x64xf32>
    %cst_28 = arith.constant dense<0.000000e+00> : vector<64x64xf32>
    %49 = tpu.matmul %46, %48, %cst_28 {dimension_numbers = #tpu.dot_dimension_numbers<[1], [0], [0], [1], [0, 0, 1, 1], [], []>} : vector<64x32xf32>, vector<32x64xf32>, vector<64x64xf32> -> vector<64x64xf32>
    %c1_29 = arith.constant 1 : index
    %c0_30 = arith.constant 0 : index
    %c0_31 = arith.constant 0 : index
    %50 = vector.load %arg5[%c1_29, %c0_30, %c0_31] : memref<3x32x64xf32, #tpu.memory_space<vmem>>, vector<1x32x64xf32>
    %51 = vector.shape_cast %50 : vector<1x32x64xf32> to vector<32x64xf32>
    %cst_32 = arith.constant dense<0.000000e+00> : vector<64x64xf32>
    %52 = tpu.matmul %46, %51, %cst_32 {dimension_numbers = #tpu.dot_dimension_numbers<[1], [0], [0], [1], [0, 0, 1, 1], [], []>} : vector<64x32xf32>, vector<32x64xf32>, vector<64x64xf32> -> vector<64x64xf32>
    %c2_33 = arith.constant 2 : index
    %c0_34 = arith.constant 0 : index
    %c0_35 = arith.constant 0 : index
    %53 = vector.load %arg5[%c2_33, %c0_34, %c0_35] : memref<3x32x64xf32, #tpu.memory_space<vmem>>, vector<1x32x64xf32>
    %54 = vector.shape_cast %53 : vector<1x32x64xf32> to vector<32x64xf32>
    %cst_36 = arith.constant dense<0.000000e+00> : vector<64x64xf32>
    %55 = tpu.matmul %46, %54, %cst_36 {dimension_numbers = #tpu.dot_dimension_numbers<[1], [0], [0], [1], [0, 0, 1, 1], [], []>} : vector<64x32xf32>, vector<32x64xf32>, vector<64x64xf32> -> vector<64x64xf32>
    %56 = tpu.concatenate %49, %52, %55 in 0 : vector<64x64xf32>, vector<64x64xf32>, vector<64x64xf32> -> vector<192x64xf32>
    %c1_37 = arith.constant 1 : index
    %c0_38 = arith.constant 0 : index
    %c0_39 = arith.constant 0 : index
    %57 = vector.load %arg3[%c1_37, %c0_38, %c0_39] : memref<3x64x192xf32, #tpu.memory_space<vmem>>, vector<1x64x192xf32>
    %58 = vector.shape_cast %57 : vector<1x64x192xf32> to vector<64x192xf32>
    %cst_40 = arith.constant dense<0.000000e+00> : vector<64x64xf32>
    %59 = tpu.matmul %58, %56, %cst_40 {dimension_numbers = #tpu.dot_dimension_numbers<[1], [0], [0], [1], [0, 0, 1, 1], [], []>} : vector<64x192xf32>, vector<192x64xf32>, vector<64x64xf32> -> vector<64x64xf32>
    %60 = vector.extract_strided_slice %5 {offsets = [64, 0], sizes = [64, 2], strides = [1, 1]} : vector<192x2xf32> to vector<64x2xf32>
    %61 = tpu.iota {dimensions = array<i32: 1>} : vector<64x64xi32>
    %cst_41 = arith.constant 0.000000e+00 : f32
    %62 = vector.broadcast %cst_41 : f32 to vector<64x64xf32>
    %c0_i32_42 = arith.constant 0 : i32
    %63 = vector.broadcast %c0_i32_42 : i32 to vector<64x64xi32>
    %64 = arith.cmpi sge, %61, %63 : vector<64x64xi32>
    %c32_i32_43 = arith.constant 32 : i32
    %65 = vector.broadcast %c32_i32_43 : i32 to vector<64x64xi32>
    %66 = arith.cmpi slt, %61, %65 : vector<64x64xi32>
    %67 = arith.andi %64, %66 : vector<64x64xi1>
    %68 = vector.extract_strided_slice %60 {offsets = [0, 0], sizes = [64, 1], strides = [1, 1]} : vector<64x2xf32> to vector<64x1xf32>
    %69 = vector.shape_cast %68 : vector<64x1xf32> to vector<64x1xf32>
    %70 = vector.broadcast %69 : vector<64x1xf32> to vector<64x64xf32>
    %71 = arith.select %67, %70, %62 : vector<64x64xi1>, vector<64x64xf32>
    %c32_i32_44 = arith.constant 32 : i32
    %72 = vector.broadcast %c32_i32_44 : i32 to vector<64x64xi32>
    %73 = arith.cmpi sge, %61, %72 : vector<64x64xi32>
    %c64_i32 = arith.constant 64 : i32
    %74 = vector.broadcast %c64_i32 : i32 to vector<64x64xi32>
    %75 = arith.cmpi slt, %61, %74 : vector<64x64xi32>
    %76 = arith.andi %73, %75 : vector<64x64xi1>
    %77 = vector.extract_strided_slice %60 {offsets = [0, 1], sizes = [64, 1], strides = [1, 1]} : vector<64x2xf32> to vector<64x1xf32>
    %78 = vector.shape_cast %77 : vector<64x1xf32> to vector<64x1xf32>
    %79 = vector.broadcast %78 : vector<64x1xf32> to vector<64x64xf32>
    %80 = arith.select %76, %79, %71 : vector<64x64xi1>, vector<64x64xf32>
    %81 = arith.addf %59, %80 : vector<64x64xf32>
    %cst_45 = arith.constant 0.000000e+00 : f32
    %82 = vector.broadcast %cst_45 : f32 to vector<64x64xf32>
    %83 = arith.cmpf oge, %81, %82 : vector<64x64xf32>
    %cst_46 = arith.constant 2.000000e-01 : f32
    %84 = vector.broadcast %cst_46 : f32 to vector<64x64xf32>
    %85 = arith.mulf %84, %81 : vector<64x64xf32>
    %86 = arith.select %83, %81, %85 : vector<64x64xi1>, vector<64x64xf32>
    %c0_47 = arith.constant 0 : index
    %c0_48 = arith.constant 0 : index
    %c0_49 = arith.constant 0 : index
    %87 = vector.load %arg6[%c0_47, %c0_48, %c0_49] : memref<3x64x128xf32, #tpu.memory_space<vmem>>, vector<1x64x128xf32>
    %88 = vector.shape_cast %87 : vector<1x64x128xf32> to vector<64x128xf32>
    %cst_50 = arith.constant dense<0.000000e+00> : vector<64x128xf32>
    %89 = tpu.matmul %86, %88, %cst_50 {dimension_numbers = #tpu.dot_dimension_numbers<[1], [0], [0], [1], [0, 0, 1, 1], [], []>} : vector<64x64xf32>, vector<64x128xf32>, vector<64x128xf32> -> vector<64x128xf32>
    %c1_51 = arith.constant 1 : index
    %c0_52 = arith.constant 0 : index
    %c0_53 = arith.constant 0 : index
    %90 = vector.load %arg6[%c1_51, %c0_52, %c0_53] : memref<3x64x128xf32, #tpu.memory_space<vmem>>, vector<1x64x128xf32>
    %91 = vector.shape_cast %90 : vector<1x64x128xf32> to vector<64x128xf32>
    %cst_54 = arith.constant dense<0.000000e+00> : vector<64x128xf32>
    %92 = tpu.matmul %86, %91, %cst_54 {dimension_numbers = #tpu.dot_dimension_numbers<[1], [0], [0], [1], [0, 0, 1, 1], [], []>} : vector<64x64xf32>, vector<64x128xf32>, vector<64x128xf32> -> vector<64x128xf32>
    %c2_55 = arith.constant 2 : index
    %c0_56 = arith.constant 0 : index
    %c0_57 = arith.constant 0 : index
    %93 = vector.load %arg6[%c2_55, %c0_56, %c0_57] : memref<3x64x128xf32, #tpu.memory_space<vmem>>, vector<1x64x128xf32>
    %94 = vector.shape_cast %93 : vector<1x64x128xf32> to vector<64x128xf32>
    %cst_58 = arith.constant dense<0.000000e+00> : vector<64x128xf32>
    %95 = tpu.matmul %86, %94, %cst_58 {dimension_numbers = #tpu.dot_dimension_numbers<[1], [0], [0], [1], [0, 0, 1, 1], [], []>} : vector<64x64xf32>, vector<64x128xf32>, vector<64x128xf32> -> vector<64x128xf32>
    %96 = tpu.concatenate %89, %92, %95 in 0 : vector<64x128xf32>, vector<64x128xf32>, vector<64x128xf32> -> vector<192x128xf32>
    %c2_59 = arith.constant 2 : index
    %c0_60 = arith.constant 0 : index
    %c0_61 = arith.constant 0 : index
    %97 = vector.load %arg3[%c2_59, %c0_60, %c0_61] : memref<3x64x192xf32, #tpu.memory_space<vmem>>, vector<1x64x192xf32>
    %98 = vector.shape_cast %97 : vector<1x64x192xf32> to vector<64x192xf32>
    %cst_62 = arith.constant dense<0.000000e+00> : vector<64x128xf32>
    %99 = tpu.matmul %98, %96, %cst_62 {dimension_numbers = #tpu.dot_dimension_numbers<[1], [0], [0], [1], [0, 0, 1, 1], [], []>} : vector<64x192xf32>, vector<192x128xf32>, vector<64x128xf32> -> vector<64x128xf32>
    %100 = vector.extract_strided_slice %5 {offsets = [128, 0], sizes = [64, 2], strides = [1, 1]} : vector<192x2xf32> to vector<64x2xf32>
    %101 = tpu.iota {dimensions = array<i32: 1>} : vector<64x128xi32>
    %cst_63 = arith.constant 0.000000e+00 : f32
    %102 = vector.broadcast %cst_63 : f32 to vector<64x128xf32>
    %c0_i32_64 = arith.constant 0 : i32
    %103 = vector.broadcast %c0_i32_64 : i32 to vector<64x128xi32>
    %104 = arith.cmpi sge, %101, %103 : vector<64x128xi32>
    %c64_i32_65 = arith.constant 64 : i32
    %105 = vector.broadcast %c64_i32_65 : i32 to vector<64x128xi32>
    %106 = arith.cmpi slt, %101, %105 : vector<64x128xi32>
    %107 = arith.andi %104, %106 : vector<64x128xi1>
    %108 = vector.extract_strided_slice %100 {offsets = [0, 0], sizes = [64, 1], strides = [1, 1]} : vector<64x2xf32> to vector<64x1xf32>
    %109 = vector.shape_cast %108 : vector<64x1xf32> to vector<64x1xf32>
    %110 = vector.broadcast %109 : vector<64x1xf32> to vector<64x128xf32>
    %111 = arith.select %107, %110, %102 : vector<64x128xi1>, vector<64x128xf32>
    %c64_i32_66 = arith.constant 64 : i32
    %112 = vector.broadcast %c64_i32_66 : i32 to vector<64x128xi32>
    %113 = arith.cmpi sge, %101, %112 : vector<64x128xi32>
    %c128_i32 = arith.constant 128 : i32
    %114 = vector.broadcast %c128_i32 : i32 to vector<64x128xi32>
    %115 = arith.cmpi slt, %101, %114 : vector<64x128xi32>
    %116 = arith.andi %113, %115 : vector<64x128xi1>
    %117 = vector.extract_strided_slice %100 {offsets = [0, 1], sizes = [64, 1], strides = [1, 1]} : vector<64x2xf32> to vector<64x1xf32>
    %118 = vector.shape_cast %117 : vector<64x1xf32> to vector<64x1xf32>
    %119 = vector.broadcast %118 : vector<64x1xf32> to vector<64x128xf32>
    %120 = arith.select %116, %119, %111 : vector<64x128xi1>, vector<64x128xf32>
    %121 = arith.addf %99, %120 : vector<64x128xf32>
    %c0_67 = arith.constant 0 : index
    %c0_68 = arith.constant 0 : index
    %c0_69 = arith.constant 0 : index
    %122 = vector.load %arg9[%c0_67, %c0_68, %c0_69] : memref<3x64x1xf32, #tpu.memory_space<vmem>>, vector<1x64x1xf32>
    %123 = vector.shape_cast %122 : vector<1x64x1xf32> to vector<64x1xf32>
    %c1_70 = arith.constant 1 : index
    %c0_71 = arith.constant 0 : index
    %c0_72 = arith.constant 0 : index
    %124 = vector.load %arg9[%c1_70, %c0_71, %c0_72] : memref<3x64x1xf32, #tpu.memory_space<vmem>>, vector<1x64x1xf32>
    %125 = vector.shape_cast %124 : vector<1x64x1xf32> to vector<64x1xf32>
    %c2_73 = arith.constant 2 : index
    %c0_74 = arith.constant 0 : index
    %c0_75 = arith.constant 0 : index
    %126 = vector.load %arg9[%c2_73, %c0_74, %c0_75] : memref<3x64x1xf32, #tpu.memory_space<vmem>>, vector<1x64x1xf32>
    %127 = vector.shape_cast %126 : vector<1x64x1xf32> to vector<64x1xf32>
    %128 = vector.broadcast %123 : vector<64x1xf32> to vector<64x128xf32>
    %129 = arith.mulf %121, %128 : vector<64x128xf32>
    %130 = vector.broadcast %125 : vector<64x1xf32> to vector<64x128xf32>
    %131 = arith.addf %129, %130 : vector<64x128xf32>
    %c0_76 = arith.constant 0 : index
    %c0_77 = arith.constant 0 : index
    %132 = vector.load %arg10[%c0_76, %c0_77] : memref<64x64xf32, #tpu.memory_space<vmem>>, vector<64x64xf32>
    %133 = arith.mulf %131, %131 : vector<64x128xf32>
    %cst_78 = arith.constant dense<0.000000e+00> : vector<64x128xf32>
    %134 = tpu.matmul %132, %133, %cst_78 {dimension_numbers = #tpu.dot_dimension_numbers<[1], [0], [0], [1], [0, 0, 1, 1], [], []>} : vector<64x64xf32>, vector<64x128xf32>, vector<64x128xf32> -> vector<64x128xf32>
    %cst_79 = arith.constant 9.99999996E-13 : f32
    %135 = vector.broadcast %cst_79 : f32 to vector<64x128xf32>
    %136 = arith.maximumf %134, %135 : vector<64x128xf32>
    %137 = math.rsqrt %136 : vector<64x128xf32>
    %138 = arith.mulf %131, %137 : vector<64x128xf32>
    %139 = vector.broadcast %125 : vector<64x1xf32> to vector<64x128xf32>
    %140 = arith.subf %138, %139 : vector<64x128xf32>
    %141 = vector.broadcast %127 : vector<64x1xf32> to vector<64x128xf32>
    %142 = arith.mulf %140, %141 : vector<64x128xf32>
    %c0_80 = arith.constant 0 : index
    %c0_81 = arith.constant 0 : index
    %143 = vector.load %arg11[%c0_80, %c0_81] : memref<64x128xf32, #tpu.memory_space<vmem>>, vector<64x128xf32>
    tpu.vector_store %arg11[%c0_80, %c0_81], %142 {strides = array<i32>} : memref<64x128xf32, #tpu.memory_space<vmem>>, vector<64x128xf32>,
    return
  }
  func.func @transform_0(%arg0: i32) -> (i32, i32) {
    %c0_i32 = arith.constant 0 : i32
    %c0_i32_0 = arith.constant 0 : i32
    %c0_i32_1 = arith.constant 0 : i32
    return %c0_i32, %c0_i32_0 : i32, i32
  }
  func.func @transform_1(%arg0: i32) -> (i32, i32) {
    %c0_i32 = arith.constant 0 : i32
    %c0_i32_0 = arith.constant 0 : i32
    %c0_i32_1 = arith.constant 0 : i32
    return %c0_i32, %c0_i32_0 : i32, i32
  }
  func.func @transform_2(%arg0: i32) -> (i32, i32, i32) {
    %c0_i32 = arith.constant 0 : i32
    %c0_i32_0 = arith.constant 0 : i32
    %c0_i32_1 = arith.constant 0 : i32
    %c0_i32_2 = arith.constant 0 : i32
    return %c0_i32, %c0_i32_0, %c0_i32_1 : i32, i32, i32
  }
  func.func @transform_3(%arg0: i32) -> (i32, i32, i32) {
    %c0_i32 = arith.constant 0 : i32
    %c0_i32_0 = arith.constant 0 : i32
    %c0_i32_1 = arith.constant 0 : i32
    %c0_i32_2 = arith.constant 0 : i32
    return %c0_i32, %c0_i32_0, %c0_i32_1 : i32, i32, i32
  }
  func.func @transform_4(%arg0: i32) -> (i32, i32, i32) {
    %c0_i32 = arith.constant 0 : i32
    %c0_i32_0 = arith.constant 0 : i32
    %c0_i32_1 = arith.constant 0 : i32
    %c0_i32_2 = arith.constant 0 : i32
    return %c0_i32, %c0_i32_0, %c0_i32_1 : i32, i32, i32
  }
  func.func @transform_5(%arg0: i32) -> (i32, i32, i32) {
    %c0_i32 = arith.constant 0 : i32
    %c0_i32_0 = arith.constant 0 : i32
    %c0_i32_1 = arith.constant 0 : i32
    %c0_i32_2 = arith.constant 0 : i32
    return %c0_i32, %c0_i32_0, %c0_i32_1 : i32, i32, i32
  }
  func.func @transform_6(%arg0: i32) -> (i32, i32) {
    %c0_i32 = arith.constant 0 : i32
    %c0_i32_0 = arith.constant 0 : i32
    %c0_i32_1 = arith.constant 0 : i32
    return %c0_i32, %c0_i32_0 : i32, i32
  }
  func.func @transform_7(%arg0: i32) -> (i32, i32) {
    %c0_i32 = arith.constant 0 : i32
    %c0_i32_0 = arith.constant 0 : i32
    %c0_i32_1 = arith.constant 0 : i32
    return %c0_i32, %c0_i32_0 : i32, i32
  }
  func.func @transform_8(%arg0: i32) -> (i32, i32, i32) {
    %c0_i32 = arith.constant 0 : i32
    %c0_i32_0 = arith.constant 0 : i32
    %c0_i32_1 = arith.constant 0 : i32
    %c0_i32_2 = arith.constant 0 : i32
    return %c0_i32, %c0_i32_0, %c0_i32_1 : i32, i32, i32
  }
  func.func @transform_9(%arg0: i32) -> (i32, i32) {
    %c0_i32 = arith.constant 0 : i32
    %c0_i32_0 = arith.constant 0 : i32
    %c0_i32_1 = arith.constant 0 : i32
    return %c0_i32, %c0_i32_0 : i32, i32
  }
  func.func @transform_10(%arg0: i32) -> (i32, i32) {
    %c0_i32 = arith.constant 0 : i32
    %c0_i32_0 = arith.constant 0 : i32
    %c0_i32_1 = arith.constant 0 : i32
    return %c0_i32, %c0_i32_0 : i32, i32
  }
}

</mosaic_0001>

<llo_original>
// kernel: decoder_forward.1
$region0: #{decoder_forward.1}
  #allocation0 [shape = 'u32[]', space=smem, size = 0x4, offset = 0x4, fixed_abs, tag = 'smem constant byte address 0x4 - core index']
  #allocation1 [shape = 'u32[144,128]{1,0:T(1,128)}', space=vmem, size = 0x12000, scoped, tag = 'internal scratch']
  %s0 = inlined_call_operand.vmem [shape: f32[64,16], index: 0, kind: input, shape index: {}]
  %s1 = inlined_call_operand.vmem [shape: f32[72,2], index: 1, kind: input, shape index: {}]
  %s2 = inlined_call_operand.vmem [shape: f32[3,64,192], index: 2, kind: input, shape index: {}]
  %s3 = inlined_call_operand.vmem [shape: f32[3,16,32], index: 3, kind: input, shape index: {}]
  %s4 = inlined_call_operand.vmem [shape: f32[3,32,64], index: 4, kind: input, shape index: {}]
  %s5 = inlined_call_operand.vmem [shape: f32[3,64,128], index: 5, kind: input, shape index: {}]
  %s6 = inlined_call_operand.vmem [shape: f32[192,72], index: 6, kind: input, shape index: {}]
  %s7 = inlined_call_operand.vmem [shape: f32[192,1], index: 7, kind: input, shape index: {}]
  %s8 = inlined_call_operand.vmem [shape: f32[3,64,1], index: 8, kind: input, shape index: {}]
  %s9 = inlined_call_operand.vmem [shape: f32[64,64], index: 9, kind: input, shape index: {}]
  %s10 = inlined_call_operand.vmem [shape: f32[64,128], index: 10, kind: output, shape index: {}]
  %s11 = sld [smem:[#allocation0]]
  $region50: #{decoder_forward.1} parent=0
    _
  %s13 = ssub.s32 1, %s11
  %s14 = scalar_select 0, %s13, %s11
  // Predicated region
  $region2: #{decoder_forward.1} parent=0 // pred_check
    _
  $region3: #{decoder_forward.1} parent=0 // pred_check_branch
    %16 = sbr.rel (0) target = $region5
  $region4: #{decoder_forward.1} parent=0 // pred_region
    _
  $region5: #{decoder_forward.1} parent=0 // pred_fallthru
    _
  // Predicated region
  $region6: #{decoder_forward.1} parent=0 // pred_check
    _
  $region7: #{decoder_forward.1} parent=0 // pred_check_branch
    %18 = sbr.rel (0) target = $region9
  $region8: #{decoder_forward.1} parent=0 // pred_region
    _
  $region9: #{decoder_forward.1} parent=0 // pred_fallthru
    _
  // Predicated region
  $region10: #{decoder_forward.1} parent=0 // pred_check
    _
  $region11: #{decoder_forward.1} parent=0 // pred_check_branch
    %20 = sbr.rel (0) target = $region13
  $region12: #{decoder_forward.1} parent=0 // pred_region
    _
  $region13: #{decoder_forward.1} parent=0 // pred_fallthru
    _
  // Predicated region
  $region14: #{decoder_forward.1} parent=0 // pred_check
    _
  $region15: #{decoder_forward.1} parent=0 // pred_check_branch
    %22 = sbr.rel (0) target = $region17
  $region16: #{decoder_forward.1} parent=0 // pred_region
    _
  $region17: #{decoder_forward.1} parent=0 // pred_fallthru
    _
  // Predicated region
  $region18: #{decoder_forward.1} parent=0 // pred_check
    _
  $region19: #{decoder_forward.1} parent=0 // pred_check_branch
    %24 = sbr.rel (0) target = $region21
  $region20: #{decoder_forward.1} parent=0 // pred_region
    _
  $region21: #{decoder_forward.1} parent=0 // pred_fallthru
    _
  // Predicated region
  $region22: #{decoder_forward.1} parent=0 // pred_check
    _
  $region23: #{decoder_forward.1} parent=0 // pred_check_branch
    %26 = sbr.rel (0) target = $region25
  $region24: #{decoder_forward.1} parent=0 // pred_region
    _
  $region25: #{decoder_forward.1} parent=0 // pred_fallthru
    _
  // Predicated region
  $region26: #{decoder_forward.1} parent=0 // pred_check
    _
  $region27: #{decoder_forward.1} parent=0 // pred_check_branch
    %28 = sbr.rel (0) target = $region29
  $region28: #{decoder_forward.1} parent=0 // pred_region
    _
  $region29: #{decoder_forward.1} parent=0 // pred_fallthru
    _
  // Predicated region
  $region30: #{decoder_forward.1} parent=0 // pred_check
    _
  $region31: #{decoder_forward.1} parent=0 // pred_check_branch
    %30 = sbr.rel (0) target = $region33
  $region32: #{decoder_forward.1} parent=0 // pred_region
    _
  $region33: #{decoder_forward.1} parent=0 // pred_fallthru
    _
  // Predicated region
  $region34: #{decoder_forward.1} parent=0 // pred_check
    _
  $region35: #{decoder_forward.1} parent=0 // pred_check_branch
    %32 = sbr.rel (0) target = $region37
  $region36: #{decoder_forward.1} parent=0 // pred_region
    _
  $region37: #{decoder_forward.1} parent=0 // pred_fallthru
    _
  // Predicated region
  $region38: #{decoder_forward.1} parent=0 // pred_check
    _
  $region39: #{decoder_forward.1} parent=0 // pred_check_branch
    %34 = sbr.rel (0) target = $region41
  $region40: #{decoder_forward.1} parent=0 // pred_region
    _
  $region41: #{decoder_forward.1} parent=0 // pred_fallthru
    _
  %v35 = vld [vmem:[%s6] sm:$0xff]
  %v36 = vld [vmem:[%s6 + $0x8] sm:$0xff]
  %v37 = vld [vmem:[%s6 + $0x10] sm:$0xff]
  %v38 = vld [vmem:[%s6 + $0x18] sm:$0xff]
  %v39 = vld [vmem:[%s6 + $0x20] sm:$0xff]
  %v40 = vld [vmem:[%s6 + $0x28] sm:$0xff]
  %v41 = vld [vmem:[%s6 + $0x30] sm:$0xff]
  %v42 = vld [vmem:[%s6 + $0x38] sm:$0xff]
  %v43 = vld [vmem:[%s6 + $0x40] sm:$0xff]
  %v44 = vld [vmem:[%s6 + $0x48] sm:$0xff]
  %v45 = vld [vmem:[%s6 + $0x50] sm:$0xff]
  %v46 = vld [vmem:[%s6 + $0x58] sm:$0xff]
  %v47 = vld [vmem:[%s6 + $0x60] sm:$0xff]
  %v48 = vld [vmem:[%s6 + $0x68] sm:$0xff]
  %v49 = vld [vmem:[%s6 + $0x70] sm:$0xff]
  %v50 = vld [vmem:[%s6 + $0x78] sm:$0xff]
  %v51 = vld [vmem:[%s6 + $0x80] sm:$0xff]
  %v52 = vld [vmem:[%s6 + $0x88] sm:$0xff]
  %v53 = vld [vmem:[%s6 + $0x90] sm:$0xff]
  %v54 = vld [vmem:[%s6 + $0x98] sm:$0xff]
  %v55 = vld [vmem:[%s6 + $0xa0] sm:$0xff]
  %v56 = vld [vmem:[%s6 + $0xa8] sm:$0xff]
  %v57 = vld [vmem:[%s6 + $0xb0] sm:$0xff]
  %v58 = vld [vmem:[%s6 + $0xb8] sm:$0xff]
  %v59 = vld [vmem:[%s1] sm:$0xff]
  %v60 = vld [vmem:[%s1 + $0x8] sm:$0xff]
  %v61 = vld [vmem:[%s1 + $0x10] sm:$0xff]
  %v62 = vld [vmem:[%s1 + $0x18] sm:$0xff]
  %v63 = vld [vmem:[%s1 + $0x20] sm:$0xff]
  %v64 = vld [vmem:[%s1 + $0x28] sm:$0xff]
  %v65 = vld [vmem:[%s1 + $0x30] sm:$0xff]
  %v66 = vld [vmem:[%s1 + $0x38] sm:$0xff]
  %v67 = vld [vmem:[%s1 + $0x40] sm:$0xff]
  %v68 = vld [vmem:[%s7] sm:$0xff]
  %v69 = vld [vmem:[%s7 + $0x8] sm:$0xff]
  %v70 = vld [vmem:[%s7 + $0x10] sm:$0xff]
  %v71 = vld [vmem:[%s7 + $0x18] sm:$0xff]
  %v72 = vld [vmem:[%s7 + $0x20] sm:$0xff]
  %v73 = vld [vmem:[%s7 + $0x28] sm:$0xff]
  %v74 = vld [vmem:[%s7 + $0x30] sm:$0xff]
  %v75 = vld [vmem:[%s7 + $0x38] sm:$0xff]
  %v76 = vld [vmem:[%s7 + $0x40] sm:$0xff]
  %v77 = vld [vmem:[%s7 + $0x48] sm:$0xff]
  %v78 = vld [vmem:[%s7 + $0x50] sm:$0xff]
  %v79 = vld [vmem:[%s7 + $0x58] sm:$0xff]
  %v80 = vld [vmem:[%s7 + $0x60] sm:$0xff]
  %v81 = vld [vmem:[%s7 + $0x68] sm:$0xff]
  %v82 = vld [vmem:[%s7 + $0x70] sm:$0xff]
  %v83 = vld [vmem:[%s7 + $0x78] sm:$0xff]
  %v84 = vld [vmem:[%s7 + $0x80] sm:$0xff]
  %v85 = vld [vmem:[%s7 + $0x88] sm:$0xff]
  %v86 = vld [vmem:[%s7 + $0x90] sm:$0xff]
  %v87 = vld [vmem:[%s7 + $0x98] sm:$0xff]
  %v88 = vld [vmem:[%s7 + $0xa0] sm:$0xff]
  %v89 = vld [vmem:[%s7 + $0xa8] sm:$0xff]
  %v90 = vld [vmem:[%s7 + $0xb0] sm:$0xff]
  %v91 = vld [vmem:[%s7 + $0xb8] sm:$0xff]
  %93 = vset.pattern.permute.xlu0 0
  %94 = vperm.xlu0 %93, %v68
  %v95 = vpop.permute.xlu0 %94
  %98 = vset.pattern.permute.xlu0 0
  %99 = vperm.xlu0 %98, %v69
  %v100 = vpop.permute.xlu0 %99
  %103 = vset.pattern.permute.xlu0 0
  %104 = vperm.xlu0 %103, %v70
  %v105 = vpop.permute.xlu0 %104
  %108 = vset.pattern.permute.xlu0 0
  %109 = vperm.xlu0 %108, %v71
  %v110 = vpop.permute.xlu0 %109
  %113 = vset.pattern.permute.xlu0 0
  %114 = vperm.xlu0 %113, %v72
  %v115 = vpop.permute.xlu0 %114
  %118 = vset.pattern.permute.xlu0 0
  %119 = vperm.xlu0 %118, %v73
  %v120 = vpop.permute.xlu0 %119
  %123 = vset.pattern.permute.xlu0 0
  %124 = vperm.xlu0 %123, %v74
  %v125 = vpop.permute.xlu0 %124
  %128 = vset.pattern.permute.xlu0 0
  %129 = vperm.xlu0 %128, %v75
  %v130 = vpop.permute.xlu0 %129
  %133 = vset.pattern.permute.xlu0 0
  %134 = vperm.xlu0 %133, %v76
  %v135 = vpop.permute.xlu0 %134
  %138 = vset.pattern.permute.xlu0 0
  %139 = vperm.xlu0 %138, %v77
  %v140 = vpop.permute.xlu0 %139
  %143 = vset.pattern.permute.xlu0 0
  %144 = vperm.xlu0 %143, %v78
  %v145 = vpop.permute.xlu0 %144
  %148 = vset.pattern.permute.xlu0 0
  %149 = vperm.xlu0 %148, %v79
  %v150 = vpop.permute.xlu0 %149
  %153 = vset.pattern.permute.xlu0 0
  %154 = vperm.xlu0 %153, %v80
  %v155 = vpop.permute.xlu0 %154
  %158 = vset.pattern.permute.xlu0 0
  %159 = vperm.xlu0 %158, %v81
  %v160 = vpop.permute.xlu0 %159
  %163 = vset.pattern.permute.xlu0 0
  %164 = vperm.xlu0 %163, %v82
  %v165 = vpop.permute.xlu0 %164
  %168 = vset.pattern.permute.xlu0 0
  %169 = vperm.xlu0 %168, %v83
  %v170 = vpop.permute.xlu0 %169
  %173 = vset.pattern.permute.xlu0 0
  %174 = vperm.xlu0 %173, %v84
  %v175 = vpop.permute.xlu0 %174
  %178 = vset.pattern.permute.xlu0 0
  %179 = vperm.xlu0 %178, %v85
  %v180 = vpop.permute.xlu0 %179
  %183 = vset.pattern.permute.xlu0 0
  %184 = vperm.xlu0 %183, %v86
  %v185 = vpop.permute.xlu0 %184
  %188 = vset.pattern.permute.xlu0 0
  %189 = vperm.xlu0 %188, %v87
  %v190 = vpop.permute.xlu0 %189
  %193 = vset.pattern.permute.xlu0 0
  %194 = vperm.xlu0 %193, %v88
  %v195 = vpop.permute.xlu0 %194
  %198 = vset.pattern.permute.xlu0 0
  %199 = vperm.xlu0 %198, %v89
  %v200 = vpop.permute.xlu0 %199
  %203 = vset.pattern.permute.xlu0 0
  %204 = vperm.xlu0 %203, %v90
  %v205 = vpop.permute.xlu0 %204
  %208 = vset.pattern.permute.xlu0 0
  %209 = vperm.xlu0 %208, %v91
  %v210 = vpop.permute.xlu0 %209
  %vm212 = vcmask 588800
  %v214 = vsel %vm212, %v35, 0
  %v217 = vsel %vm212, %v36, 0
  %v220 = vsel %vm212, %v37, 0
  %v223 = vsel %vm212, %v38, 0
  %v226 = vsel %vm212, %v39, 0
  %v229 = vsel %vm212, %v40, 0
  %v232 = vsel %vm212, %v41, 0
  %v235 = vsel %vm212, %v42, 0
  %v238 = vsel %vm212, %v43, 0
  %v241 = vsel %vm212, %v44, 0
  %v244 = vsel %vm212, %v45, 0
  %v247 = vsel %vm212, %v46, 0
  %v250 = vsel %vm212, %v47, 0
  %v253 = vsel %vm212, %v48, 0
  %v256 = vsel %vm212, %v49, 0
  %v259 = vsel %vm212, %v50, 0
  %v262 = vsel %vm212, %v51, 0
  %v265 = vsel %vm212, %v52, 0
  %v268 = vsel %vm212, %v53, 0
  %v271 = vsel %vm212, %v54, 0
  %v274 = vsel %vm212, %v55, 0
  %v277 = vsel %vm212, %v56, 0
  %v280 = vsel %vm212, %v57, 0
  %v283 = vsel %vm212, %v58, 0
  %285 = vmatprep.subr.mxu0 0.0
  %286 = vmatpush1.msra.mxu0 %v59
  %287 = vmatprep.subr.mxu0 0.0
  %288 = vmatpush1.msra.mxu0 %v60
  %289 = vmatprep.subr.mxu0 0.0
  %290 = vmatpush1.msra.mxu0 %v61
  %291 = vmatprep.subr.mxu0 0.0
  %292 = vmatpush1.msra.mxu0 %v62
  %293 = vmatprep.subr.mxu0 0.0
  %294 = vmatpush1.msra.mxu0 %v63
  %295 = vmatprep.subr.mxu0 0.0
  %296 = vmatpush1.msra.mxu0 %v64
  %297 = vmatprep.subr.mxu0 0.0
  %298 = vmatpush1.msra.mxu0 %v65
  %299 = vmatprep.subr.mxu0 0.0
  %300 = vmatpush1.msra.mxu0 %v66
  %301 = vmatprep.subr.mxu0 0.0
  %302 = vmatpush1.msra.mxu0 %v67
  %303 = vmatprep.subr.mxu0 0.0
  %304 = vmatpush1.msra.mxu0 0.0
  %305 = vmatprep.subr.mxu0 0.0
  %306 = vmatpush1.msra.mxu0 0.0
  %307 = vmatprep.subr.mxu0 0.0
  %308 = vmatpush1.msra.mxu0 0.0
  %309 = vmatprep.subr.mxu0 0.0
  %310 = vmatpush1.msra.mxu0 0.0
  %311 = vmatprep.subr.mxu0 0.0
  %312 = vmatpush1.msra.mxu0 0.0
  %313 = vmatprep.subr.mxu0 0.0
  %314 = vmatpush1.msra.mxu0 0.0
  %315 = vmatprep.subr.mxu0 0.0
  %316 = vmatpush1.msra.mxu0 0.0
  %317 = vmatprep.subr.mxu0 0.0
  %318 = vmatpush1.msra.mxu0 0.0
  %319 = vmatprep.subr.mxu0 0.0
  %320 = vmatpush1.msra.mxu0 0.0
  %321 = vmatprep.subr.mxu0 0.0
  %322 = vmatpush1.msra.mxu0 0.0
  %323 = vmatprep.subr.mxu0 0.0
  %324 = vmatpush1.msra.mxu0 0.0
  %325 = vmatprep.subr.mxu0 0.0
  %326 = vmatpush1.msra.mxu0 0.0
  %327 = vmatprep.subr.mxu0 0.0
  %328 = vmatpush1.msra.mxu0 0.0
  %329 = vmatprep.subr.mxu0 0.0
  %330 = vmatpush1.msra.mxu0 0.0
  %331 = vmatprep.subr.mxu0 0.0
  %332 = vmatpush1.msra.mxu0 0.0
  %333 = vmatprep.subr.mxu0 0.0
  %334 = vmatpush1.msra.mxu0 0.0
  %335 = vmatprep.subr.mxu0 0.0
  %336 = vmatpush1.msra.mxu0 0.0
  %337 = vmatprep.subr.mxu0 0.0
  %338 = vmatpush1.msra.mxu0 0.0
  %339 = vmatprep.subr.mxu0 0.0
  %340 = vmatpush1.msra.mxu0 0.0
  %341 = vmatprep.subr.mxu0 0.0
  %342 = vmatpush1.msra.mxu0 0.0
  %343 = vmatprep.subr.mxu0 0.0
  %344 = vmatpush1.msra.mxu0 0.0
  %345 = vmatprep.subr.mxu0 0.0
  %346 = vmatpush1.msra.mxu0 0.0
  %347 = vmatprep.subr.mxu0 0.0
  %348 = vmatpush1.msra.mxu0 0.0
  %349 = vmatprep.mubr.f32.mxu0 0.0
  %350 = vmatmul.mubr.f32.gmra.mrb[0].mxu0 %v214
  %v351 = vpop.f32.mrb[0].mxu0
  %v352 = vadd.f32 %v95, %v351
  %v353 = vpop.f32.mrb[0].mxu0
  %354 = vmatprep.mubr.f32.mxu0 0.0
  %355 = vmatmul.mubr.f32.gmra.mrb[0].mxu0 %v217
  %v356 = vpop.f32.mrb[0].mxu0
  %v357 = vadd.f32 %v100, %v356
  %v358 = vpop.f32.mrb[0].mxu0
  %359 = vmatprep.mubr.f32.mxu0 0.0
  %360 = vmatmul.mubr.f32.gmra.mrb[0].mxu0 %v220
  %v361 = vpop.f32.mrb[0].mxu0
  %v362 = vadd.f32 %v105, %v361
  %v363 = vpop.f32.mrb[0].mxu0
  %364 = vmatprep.mubr.f32.mxu0 0.0
  %365 = vmatmul.mubr.f32.gmra.mrb[0].mxu0 %v223
  %v366 = vpop.f32.mrb[0].mxu0
  %v367 = vadd.f32 %v110, %v366
  %v368 = vpop.f32.mrb[0].mxu0
  %369 = vmatprep.mubr.f32.mxu0 0.0
  %370 = vmatmul.mubr.f32.gmra.mrb[0].mxu0 %v226
  %v371 = vpop.f32.mrb[0].mxu0
  %v372 = vadd.f32 %v115, %v371
  %v373 = vpop.f32.mrb[0].mxu0
  %374 = vmatprep.mubr.f32.mxu0 0.0
  %375 = vmatmul.mubr.f32.gmra.mrb[0].mxu0 %v229
  %v376 = vpop.f32.mrb[0].mxu0
  %v377 = vadd.f32 %v120, %v376
  %v378 = vpop.f32.mrb[0].mxu0
  %379 = vmatprep.mubr.f32.mxu0 0.0
  %380 = vmatmul.mubr.f32.gmra.mrb[0].mxu0 %v232
  %v381 = vpop.f32.mrb[0].mxu0
  %v382 = vadd.f32 %v125, %v381
  %v383 = vpop.f32.mrb[0].mxu0
  %384 = vmatprep.mubr.f32.mxu0 0.0
  %385 = vmatmul.mubr.f32.gmra.mrb[0].mxu0 %v235
  %v386 = vpop.f32.mrb[0].mxu0
  %v387 = vadd.f32 %v130, %v386
  %v388 = vpop.f32.mrb[0].mxu0
  %389 = vmatprep.mubr.f32.mxu0 0.0
  %390 = vmatmul.mubr.f32.gmra.mrb[0].mxu0 %v238
  %v391 = vpop.f32.mrb[0].mxu0
  %v392 = vadd.f32 %v135, %v391
  %v393 = vpop.f32.mrb[0].mxu0
  %394 = vmatprep.mubr.f32.mxu0 0.0
  %395 = vmatmul.mubr.f32.gmra.mrb[0].mxu0 %v241
  %v396 = vpop.f32.mrb[0].mxu0
  %v397 = vadd.f32 %v140, %v396
  %v398 = vpop.f32.mrb[0].mxu0
  %399 = vmatprep.mubr.f32.mxu0 0.0
  %400 = vmatmul.mubr.f32.gmra.mrb[0].mxu0 %v244
  %v401 = vpop.f32.mrb[0].mxu0
  %v402 = vadd.f32 %v145, %v401
  %v403 = vpop.f32.mrb[0].mxu0
  %404 = vmatprep.mubr.f32.mxu0 0.0
  %405 = vmatmul.mubr.f32.gmra.mrb[0].mxu0 %v247
  %v406 = vpop.f32.mrb[0].mxu0
  %v407 = vadd.f32 %v150, %v406
  %v408 = vpop.f32.mrb[0].mxu0
  %409 = vmatprep.mubr.f32.mxu0 0.0
  %410 = vmatmul.mubr.f32.gmra.mrb[0].mxu0 %v250
  %v411 = vpop.f32.mrb[0].mxu0
  %v412 = vadd.f32 %v155, %v411
  %v413 = vpop.f32.mrb[0].mxu0
  %414 = vmatprep.mubr.f32.mxu0 0.0
  %415 = vmatmul.mubr.f32.gmra.mrb[0].mxu0 %v253
  %v416 = vpop.f32.mrb[0].mxu0
  %v417 = vadd.f32 %v160, %v416
  %v418 = vpop.f32.mrb[0].mxu0
  %419 = vmatprep.mubr.f32.mxu0 0.0
  %420 = vmatmul.mubr.f32.gmra.mrb[0].mxu0 %v256
  %v421 = vpop.f32.mrb[0].mxu0
  %v422 = vadd.f32 %v165, %v421
  %v423 = vpop.f32.mrb[0].mxu0
  %424 = vmatprep.mubr.f32.mxu0 0.0
  %425 = vmatmul.mubr.f32.gmra.mrb[0].mxu0 %v259
  %v426 = vpop.f32.mrb[0].mxu0
  %v427 = vadd.f32 %v170, %v426
  %v428 = vpop.f32.mrb[0].mxu0
  %429 = vmatprep.mubr.f32.mxu0 0.0
  %430 = vmatmul.mubr.f32.gmra.mrb[0].mxu0 %v262
  %v431 = vpop.f32.mrb[0].mxu0
  %v432 = vadd.f32 %v175, %v431
  %v433 = vpop.f32.mrb[0].mxu0
  %434 = vmatprep.mubr.f32.mxu0 0.0
  %435 = vmatmul.mubr.f32.gmra.mrb[0].mxu0 %v265
  %v436 = vpop.f32.mrb[0].mxu0
  %v437 = vadd.f32 %v180, %v436
  %v438 = vpop.f32.mrb[0].mxu0
  %439 = vmatprep.mubr.f32.mxu0 0.0
  %440 = vmatmul.mubr.f32.gmra.mrb[0].mxu0 %v268
  %v441 = vpop.f32.mrb[0].mxu0
  %v442 = vadd.f32 %v185, %v441
  %v443 = vpop.f32.mrb[0].mxu0
  %444 = vmatprep.mubr.f32.mxu0 0.0
  %445 = vmatmul.mubr.f32.gmra.mrb[0].mxu0 %v271
  %v446 = vpop.f32.mrb[0].mxu0
  %v447 = vadd.f32 %v190, %v446
  %v448 = vpop.f32.mrb[0].mxu0
  %449 = vmatprep.mubr.f32.mxu0 0.0
  %450 = vmatmul.mubr.f32.gmra.mrb[0].mxu0 %v274
  %v451 = vpop.f32.mrb[0].mxu0
  %v452 = vadd.f32 %v195, %v451
  %v453 = vpop.f32.mrb[0].mxu0
  %454 = vmatprep.mubr.f32.mxu0 0.0
  %455 = vmatmul.mubr.f32.gmra.mrb[0].mxu0 %v277
  %v456 = vpop.f32.mrb[0].mxu0
  %v457 = vadd.f32 %v200, %v456
  %v458 = vpop.f32.mrb[0].mxu0
  %459 = vmatprep.mubr.f32.mxu0 0.0
  %460 = vmatmul.mubr.f32.gmra.mrb[0].mxu0 %v280
  %v461 = vpop.f32.mrb[0].mxu0
  %v462 = vadd.f32 %v205, %v461
  %v463 = vpop.f32.mrb[0].mxu0
  %464 = vmatprep.mubr.f32.mxu0 0.0
  %465 = vmatmul.mubr.f32.gmra.mrb[0].mxu0 %v283
  %v466 = vpop.f32.mrb[0].mxu0
  %v467 = vadd.f32 %v210, %v466
  %v468 = vpop.f32.mrb[0].mxu0
  %469 = vdwg.mxu0
  %v470 = vld [vmem:[%s0] sm:$0xff]
  %v471 = vld [vmem:[%s0 + $0x8] sm:$0xff]
  %v472 = vld [vmem:[%s0 + $0x10] sm:$0xff]
  %v473 = vld [vmem:[%s0 + $0x18] sm:$0xff]
  %v474 = vld [vmem:[%s0 + $0x20] sm:$0xff]
  %v475 = vld [vmem:[%s0 + $0x28] sm:$0xff]
  %v476 = vld [vmem:[%s0 + $0x30] sm:$0xff]
  %v477 = vld [vmem:[%s0 + $0x38] sm:$0xff]
  %v478 = vld [vmem:[%s3] sm:$0xff]
  %v479 = vld [vmem:[%s3 + $0x8] sm:$0xff]
  %vm480 = vcmask 130048
  %v482 = vsel %vm480, %v470, 0
  %v485 = vsel %vm480, %v471, 0
  %v488 = vsel %vm480, %v472, 0
  %v491 = vsel %vm480, %v473, 0
  %v494 = vsel %vm480, %v474, 0
  %v497 = vsel %vm480, %v475, 0
  %v500 = vsel %vm480, %v476, 0
  %v503 = vsel %vm480, %v477, 0
  %505 = vmatprep.subr.mxu0 0.0
  %506 = vmatpush1.msra.mxu0 %v478
  %507 = vmatprep.subr.mxu0 0.0
  %508 = vmatpush1.msra.mxu0 %v479
  %509 = vmatprep.subr.mxu0 0.0
  %510 = vmatpush1.msra.mxu0 0.0
  %511 = vmatprep.subr.mxu0 0.0
  %512 = vmatpush1.msra.mxu0 0.0
  %513 = vmatprep.subr.mxu0 0.0
  %514 = vmatpush1.msra.mxu0 0.0
  %515 = vmatprep.subr.mxu0 0.0
  %516 = vmatpush1.msra.mxu0 0.0
  %517 = vmatprep.subr.mxu0 0.0
  %518 = vmatpush1.msra.mxu0 0.0
  %519 = vmatprep.subr.mxu0 0.0
  %520 = vmatpush1.msra.mxu0 0.0
  %521 = vmatprep.subr.mxu0 0.0
  %522 = vmatpush1.msra.mxu0 0.0
  %523 = vmatprep.subr.mxu0 0.0
  %524 = vmatpush1.msra.mxu0 0.0
  %525 = vmatprep.subr.mxu0 0.0
  %526 = vmatpush1.msra.mxu0 0.0
  %527 = vmatprep.subr.mxu0 0.0
  %528 = vmatpush1.msra.mxu0 0.0
  %529 = vmatprep.subr.mxu0 0.0
  %530 = vmatpush1.msra.mxu0 0.0
  %531 = vmatprep.subr.mxu0 0.0
  %532 = vmatpush1.msra.mxu0 0.0
  %533 = vmatprep.subr.mxu0 0.0
  %534 = vmatpush1.msra.mxu0 0.0
  %535 = vmatprep.subr.mxu0 0.0
  %536 = vmatpush1.msra.mxu0 0.0
  %537 = vmatprep.subr.mxu0 0.0
  %538 = vmatpush1.msra.mxu0 0.0
  %539 = vmatprep.subr.mxu0 0.0
  %540 = vmatpush1.msra.mxu0 0.0
  %541 = vmatprep.subr.mxu0 0.0
  %542 = vmatpush1.msra.mxu0 0.0
  %543 = vmatprep.subr.mxu0 0.0
  %544 = vmatpush1.msra.mxu0 0.0
  %545 = vmatprep.subr.mxu0 0.0
  %546 = vmatpush1.msra.mxu0 0.0
  %547 = vmatprep.subr.mxu0 0.0
  %548 = vmatpush1.msra.mxu0 0.0
  %549 = vmatprep.subr.mxu0 0.0
  %550 = vmatpush1.msra.mxu0 0.0
  %551 = vmatprep.subr.mxu0 0.0
  %552 = vmatpush1.msra.mxu0 0.0
  %553 = vmatprep.subr.mxu0 0.0
  %554 = vmatpush1.msra.mxu0 0.0
  %555 = vmatprep.subr.mxu0 0.0
  %556 = vmatpush1.msra.mxu0 0.0
  %557 = vmatprep.subr.mxu0 0.0
  %558 = vmatpush1.msra.mxu0 0.0
  %559 = vmatprep.subr.mxu0 0.0
  %560 = vmatpush1.msra.mxu0 0.0
  %561 = vmatprep.subr.mxu0 0.0
  %562 = vmatpush1.msra.mxu0 0.0
  %563 = vmatprep.subr.mxu0 0.0
  %564 = vmatpush1.msra.mxu0 0.0
  %565 = vmatprep.subr.mxu0 0.0
  %566 = vmatpush1.msra.mxu0 0.0
  %567 = vmatprep.subr.mxu0 0.0
  %568 = vmatpush1.msra.mxu0 0.0
  %569 = vmatprep.mubr.f32.mxu0 0.0
  %570 = vmatmul.mubr.f32.gmra.mrb[0].mxu0 %v482
  %v571 = vpop.f32.mrb[0].mxu0
  %v572 = vadd.f32 0.0, %v571
  %v573 = vpop.f32.mrb[0].mxu0
  %574 = vmatprep.mubr.f32.mxu0 0.0
  %575 = vmatmul.mubr.f32.gmra.mrb[0].mxu0 %v485
  %v576 = vpop.f32.mrb[0].mxu0
  %v577 = vadd.f32 0.0, %v576
  %v578 = vpop.f32.mrb[0].mxu0
  %579 = vmatprep.mubr.f32.mxu0 0.0
  %580 = vmatmul.mubr.f32.gmra.mrb[0].mxu0 %v488
  %v581 = vpop.f32.mrb[0].mxu0
  %v582 = vadd.f32 0.0, %v581
  %v583 = vpop.f32.mrb[0].mxu0
  %584 = vmatprep.mubr.f32.mxu0 0.0
  %585 = vmatmul.mubr.f32.gmra.mrb[0].mxu0 %v491
  %v586 = vpop.f32.mrb[0].mxu0
  %v587 = vadd.f32 0.0, %v586
  %v588 = vpop.f32.mrb[0].mxu0
  %589 = vmatprep.mubr.f32.mxu0 0.0
  %590 = vmatmul.mubr.f32.gmra.mrb[0].mxu0 %v494
  %v591 = vpop.f32.mrb[0].mxu0
  %v592 = vadd.f32 0.0, %v591
  %v593 = vpop.f32.mrb[0].mxu0
  %594 = vmatprep.mubr.f32.mxu0 0.0
  %595 = vmatmul.mubr.f32.gmra.mrb[0].mxu0 %v497
  %v596 = vpop.f32.mrb[0].mxu0
  %v597 = vadd.f32 0.0, %v596
  %v598 = vpop.f32.mrb[0].mxu0
  %599 = vmatprep.mubr.f32.mxu0 0.0
  %600 = vmatmul.mubr.f32.gmra.mrb[0].mxu0 %v500
  %v601 = vpop.f32.mrb[0].mxu0
  %v602 = vadd.f32 0.0, %v601
  %v603 = vpop.f32.mrb[0].mxu0
  %604 = vmatprep.mubr.f32.mxu0 0.0
  %605 = vmatmul.mubr.f32.gmra.mrb[0].mxu0 %v503
  %v606 = vpop.f32.mrb[0].mxu0
  %v607 = vadd.f32 0.0, %v606
  %v608 = vpop.f32.mrb[0].mxu0
  %609 = vdwg.mxu0
  %s610 = scalar_lea.vmem %s3, 16
  %v611 = vld [vmem:[%s610] sm:$0xff]
  %v612 = vld [vmem:[%s610 + $0x8] sm:$0xff]
  %613 = vmatprep.subr.mxu0 0.0
  %614 = vmatpush1.msra.mxu0 %v611
  %615 = vmatprep.subr.mxu0 0.0
  %616 = vmatpush1.msra.mxu0 %v612
  %617 = vmatprep.subr.mxu0 0.0
  %618 = vmatpush1.msra.mxu0 0.0
  %619 = vmatprep.subr.mxu0 0.0
  %620 = vmatpush1.msra.mxu0 0.0
  %621 = vmatprep.subr.mxu0 0.0
  %622 = vmatpush1.msra.mxu0 0.0
  %623 = vmatprep.subr.mxu0 0.0
  %624 = vmatpush1.msra.mxu0 0.0
  %625 = vmatprep.subr.mxu0 0.0
  %626 = vmatpush1.msra.mxu0 0.0
  %627 = vmatprep.subr.mxu0 0.0
  %628 = vmatpush1.msra.mxu0 0.0
  %629 = vmatprep.subr.mxu0 0.0
  %630 = vmatpush1.msra.mxu0 0.0
  %631 = vmatprep.subr.mxu0 0.0
  %632 = vmatpush1.msra.mxu0 0.0
  %633 = vmatprep.subr.mxu0 0.0
  %634 = vmatpush1.msra.mxu0 0.0
  %635 = vmatprep.subr.mxu0 0.0
  %636 = vmatpush1.msra.mxu0 0.0
  %637 = vmatprep.subr.mxu0 0.0
  %638 = vmatpush1.msra.mxu0 0.0
  %639 = vmatprep.subr.mxu0 0.0
  %640 = vmatpush1.msra.mxu0 0.0
  %641 = vmatprep.subr.mxu0 0.0
  %642 = vmatpush1.msra.mxu0 0.0
  %643 = vmatprep.subr.mxu0 0.0
  %644 = vmatpush1.msra.mxu0 0.0
  %645 = vmatprep.subr.mxu0 0.0
  %646 = vmatpush1.msra.mxu0 0.0
  %647 = vmatprep.subr.mxu0 0.0
  %648 = vmatpush1.msra.mxu0 0.0
  %649 = vmatprep.subr.mxu0 0.0
  %650 = vmatpush1.msra.mxu0 0.0
  %651 = vmatprep.subr.mxu0 0.0
  %652 = vmatpush1.msra.mxu0 0.0
  %653 = vmatprep.subr.mxu0 0.0
  %654 = vmatpush1.msra.mxu0 0.0
  %655 = vmatprep.subr.mxu0 0.0
  %656 = vmatpush1.msra.mxu0 0.0
  %657 = vmatprep.subr.mxu0 0.0
  %658 = vmatpush1.msra.mxu0 0.0
  %659 = vmatprep.subr.mxu0 0.0
  %660 = vmatpush1.msra.mxu0 0.0
  %661 = vmatprep.subr.mxu0 0.0
  %662 = vmatpush1.msra.mxu0 0.0
  %663 = vmatprep.subr.mxu0 0.0
  %664 = vmatpush1.msra.mxu0 0.0
  %665 = vmatprep.subr.mxu0 0.0
  %666 = vmatpush1.msra.mxu0 0.0
  %667 = vmatprep.subr.mxu0 0.0
  %668 = vmatpush1.msra.mxu0 0.0
  %669 = vmatprep.subr.mxu0 0.0
  %670 = vmatpush1.msra.mxu0 0.0
  %671 = vmatprep.subr.mxu0 0.0
  %672 = vmatpush1.msra.mxu0 0.0
  %673 = vmatprep.subr.mxu0 0.0
  %674 = vmatpush1.msra.mxu0 0.0
  %675 = vmatprep.subr.mxu0 0.0
  %676 = vmatpush1.msra.mxu0 0.0
  %677 = vmatprep.mubr.f32.mxu0 0.0
  %678 = vmatmul.mubr.f32.gmra.mrb[0].mxu0 %v482
  %v679 = vpop.f32.mrb[0].mxu0
  %v680 = vadd.f32 0.0, %v679
  %v681 = vpop.f32.mrb[0].mxu0
  %682 = vmatprep.mubr.f32.mxu0 0.0
  %683 = vmatmul.mubr.f32.gmra.mrb[0].mxu0 %v485
  %v684 = vpop.f32.mrb[0].mxu0
  %v685 = vadd.f32 0.0, %v684
  %v686 = vpop.f32.mrb[0].mxu0
  %687 = vmatprep.mubr.f32.mxu0 0.0
  %688 = vmatmul.mubr.f32.gmra.mrb[0].mxu0 %v488
  %v689 = vpop.f32.mrb[0].mxu0
  %v690 = vadd.f32 0.0, %v689
  %v691 = vpop.f32.mrb[0].mxu0
  %692 = vmatprep.mubr.f32.mxu0 0.0
  %693 = vmatmul.mubr.f32.gmra.mrb[0].mxu0 %v491
  %v694 = vpop.f32.mrb[0].mxu0
  %v695 = vadd.f32 0.0, %v694
  %v696 = vpop.f32.mrb[0].mxu0
  %697 = vmatprep.mubr.f32.mxu0 0.0
  %698 = vmatmul.mubr.f32.gmra.mrb[0].mxu0 %v494
  %v699 = vpop.f32.mrb[0].mxu0
  %v700 = vadd.f32 0.0, %v699
  %v701 = vpop.f32.mrb[0].mxu0
  %702 = vmatprep.mubr.f32.mxu0 0.0
  %703 = vmatmul.mubr.f32.gmra.mrb[0].mxu0 %v497
  %v704 = vpop.f32.mrb[0].mxu0
  %v705 = vadd.f32 0.0, %v704
  %v706 = vpop.f32.mrb[0].mxu0
  %707 = vmatprep.mubr.f32.mxu0 0.0
  %708 = vmatmul.mubr.f32.gmra.mrb[0].mxu0 %v500
  %v709 = vpop.f32.mrb[0].mxu0
  %v710 = vadd.f32 0.0, %v709
  %v711 = vpop.f32.mrb[0].mxu0
  %712 = vmatprep.mubr.f32.mxu0 0.0
  %713 = vmatmul.mubr.f32.gmra.mrb[0].mxu0 %v503
  %v714 = vpop.f32.mrb[0].mxu0
  %v715 = vadd.f32 0.0, %v714
  %v716 = vpop.f32.mrb[0].mxu0
  %717 = vdwg.mxu0
  %s718 = scalar_lea.vmem %s3, 32
  %v719 = vld [vmem:[%s718] sm:$0xff]
  %v720 = vld [vmem:[%s718 + $0x8] sm:$0xff]
  %721 = vmatprep.subr.mxu0 0.0
  %722 = vmatpush1.msra.mxu0 %v719
  %723 = vmatprep.subr.mxu0 0.0
  %724 = vmatpush1.msra.mxu0 %v720
  %725 = vmatprep.subr.mxu0 0.0
  %726 = vmatpush1.msra.mxu0 0.0
  %727 = vmatprep.subr.mxu0 0.0
  %728 = vmatpush1.msra.mxu0 0.0
  %729 = vmatprep.subr.mxu0 0.0
  %730 = vmatpush1.msra.mxu0 0.0
  %731 = vmatprep.subr.mxu0 0.0
  %732 = vmatpush1.msra.mxu0 0.0
  %733 = vmatprep.subr.mxu0 0.0
  %734 = vmatpush1.msra.mxu0 0.0
  %735 = vmatprep.subr.mxu0 0.0
  %736 = vmatpush1.msra.mxu0 0.0
  %737 = vmatprep.subr.mxu0 0.0
  %738 = vmatpush1.msra.mxu0 0.0
  %739 = vmatprep.subr.mxu0 0.0
  %740 = vmatpush1.msra.mxu0 0.0
  %741 = vmatprep.subr.mxu0 0.0
  %742 = vmatpush1.msra.mxu0 0.0
  %743 = vmatprep.subr.mxu0 0.0
  %744 = vmatpush1.msra.mxu0 0.0
  %745 = vmatprep.subr.mxu0 0.0
  %746 = vmatpush1.msra.mxu0 0.0
  %747 = vmatprep.subr.mxu0 0.0
  %748 = vmatpush1.msra.mxu0 0.0
  %749 = vmatprep.subr.mxu0 0.0
  %750 = vmatpush1.msra.mxu0 0.0
  %751 = vmatprep.subr.mxu0 0.0
  %752 = vmatpush1.msra.mxu0 0.0
  %753 = vmatprep.subr.mxu0 0.0
  %754 = vmatpush1.msra.mxu0 0.0
  %755 = vmatprep.subr.mxu0 0.0
  %756 = vmatpush1.msra.mxu0 0.0
  %757 = vmatprep.subr.mxu0 0.0
  %758 = vmatpush1.msra.mxu0 0.0
  %759 = vmatprep.subr.mxu0 0.0
  %760 = vmatpush1.msra.mxu0 0.0
  %761 = vmatprep.subr.mxu0 0.0
  %762 = vmatpush1.msra.mxu0 0.0
  %763 = vmatprep.subr.mxu0 0.0
  %764 = vmatpush1.msra.mxu0 0.0
  %765 = vmatprep.subr.mxu0 0.0
  %766 = vmatpush1.msra.mxu0 0.0
  %767 = vmatprep.subr.mxu0 0.0
  %768 = vmatpush1.msra.mxu0 0.0
  %769 = vmatprep.subr.mxu0 0.0
  %770 = vmatpush1.msra.mxu0 0.0
  %771 = vmatprep.subr.mxu0 0.0
  %772 = vmatpush1.msra.mxu0 0.0
  %773 = vmatprep.subr.mxu0 0.0
  %774 = vmatpush1.msra.mxu0 0.0
  %775 = vmatprep.subr.mxu0 0.0
  %776 = vmatpush1.msra.mxu0 0.0
  %777 = vmatprep.subr.mxu0 0.0
  %778 = vmatpush1.msra.mxu0 0.0
  %779 = vmatprep.subr.mxu0 0.0
  %780 = vmatpush1.msra.mxu0 0.0
  %781 = vmatprep.subr.mxu0 0.0
  %782 = vmatpush1.msra.mxu0 0.0
  %783 = vmatprep.subr.mxu0 0.0
  %784 = vmatpush1.msra.mxu0 0.0
  %785 = vmatprep.mubr.f32.mxu0 0.0
  %786 = vmatmul.mubr.f32.gmra.mrb[0].mxu0 %v482
  %v787 = vpop.f32.mrb[0].mxu0
  %v788 = vadd.f32 0.0, %v787
  %v789 = vpop.f32.mrb[0].mxu0
  %790 = vmatprep.mubr.f32.mxu0 0.0
  %791 = vmatmul.mubr.f32.gmra.mrb[0].mxu0 %v485
  %v792 = vpop.f32.mrb[0].mxu0
  %v793 = vadd.f32 0.0, %v792
  %v794 = vpop.f32.mrb[0].mxu0
  %795 = vmatprep.mubr.f32.mxu0 0.0
  %796 = vmatmul.mubr.f32.gmra.mrb[0].mxu0 %v488
  %v797 = vpop.f32.mrb[0].mxu0
  %v798 = vadd.f32 0.0, %v797
  %v799 = vpop.f32.mrb[0].mxu0
  %800 = vmatprep.mubr.f32.mxu0 0.0
  %801 = vmatmul.mubr.f32.gmra.mrb[0].mxu0 %v491
  %v802 = vpop.f32.mrb[0].mxu0
  %v803 = vadd.f32 0.0, %v802
  %v804 = vpop.f32.mrb[0].mxu0
  %805 = vmatprep.mubr.f32.mxu0 0.0
  %806 = vmatmul.mubr.f32.gmra.mrb[0].mxu0 %v494
  %v807 = vpop.f32.mrb[0].mxu0
  %v808 = vadd.f32 0.0, %v807
  %v809 = vpop.f32.mrb[0].mxu0
  %810 = vmatprep.mubr.f32.mxu0 0.0
  %811 = vmatmul.mubr.f32.gmra.mrb[0].mxu0 %v497
  %v812 = vpop.f32.mrb[0].mxu0
  %v813 = vadd.f32 0.0, %v812
  %v814 = vpop.f32.mrb[0].mxu0
  %815 = vmatprep.mubr.f32.mxu0 0.0
  %816 = vmatmul.mubr.f32.gmra.mrb[0].mxu0 %v500
  %v817 = vpop.f32.mrb[0].mxu0
  %v818 = vadd.f32 0.0, %v817
  %v819 = vpop.f32.mrb[0].mxu0
  %820 = vmatprep.mubr.f32.mxu0 0.0
  %821 = vmatmul.mubr.f32.gmra.mrb[0].mxu0 %v503
  %v822 = vpop.f32.mrb[0].mxu0
  %v823 = vadd.f32 0.0, %v822
  %v824 = vpop.f32.mrb[0].mxu0
  %825 = vdwg.mxu0
  %v826 = vld [vmem:[%s2] sm:$0xff]
  %v827 = vld [vmem:[%s2 + $0x8] sm:$0xff]
  %v828 = vld [vmem:[%s2 + $0x10] sm:$0xff]
  %v829 = vld [vmem:[%s2 + $0x18] sm:$0xff]
  %v830 = vld [vmem:[%s2 + $0x20] sm:$0xff]
  %v831 = vld [vmem:[%s2 + $0x28] sm:$0xff]
  %v832 = vld [vmem:[%s2 + $0x30] sm:$0xff]
  %v833 = vld [vmem:[%s2 + $0x38] sm:$0xff]
  %v834 = vld [vmem:[%s2 + $0x40] sm:$0xff]
  %v835 = vld [vmem:[%s2 + $0x48] sm:$0xff]
  %v836 = vld [vmem:[%s2 + $0x50] sm:$0xff]
  %v837 = vld [vmem:[%s2 + $0x58] sm:$0xff]
  %v838 = vld [vmem:[%s2 + $0x60] sm:$0xff]
  %v839 = vld [vmem:[%s2 + $0x68] sm:$0xff]
  %v840 = vld [vmem:[%s2 + $0x70] sm:$0xff]
  %v841 = vld [vmem:[%s2 + $0x78] sm:$0xff]
  %v842 = vlaneseq
  %v843 = vand.u32 %v842, 127
  %vm844 = vcmp.ge.s32.totalorder %v843, 0
  %vm845 = vcmp.lt.s32.totalorder %v843, 16
  %vm846 = vmand %vm844, %vm845
  %848 = vset.pattern.permute.xlu0 0
  %849 = vperm.xlu0 %848, %v352
  %v850 = vpop.permute.xlu0 %849
  %853 = vset.pattern.permute.xlu0 0
  %854 = vperm.xlu0 %853, %v357
  %v855 = vpop.permute.xlu0 %854
  %858 = vset.pattern.permute.xlu0 0
  %859 = vperm.xlu0 %858, %v362
  %v860 = vpop.permute.xlu0 %859
  %863 = vset.pattern.permute.xlu0 0
  %864 = vperm.xlu0 %863, %v367
  %v865 = vpop.permute.xlu0 %864
  %868 = vset.pattern.permute.xlu0 0
  %869 = vperm.xlu0 %868, %v372
  %v870 = vpop.permute.xlu0 %869
  %873 = vset.pattern.permute.xlu0 0
  %874 = vperm.xlu0 %873, %v377
  %v875 = vpop.permute.xlu0 %874
  %878 = vset.pattern.permute.xlu0 0
  %879 = vperm.xlu0 %878, %v382
  %v880 = vpop.permute.xlu0 %879
  %883 = vset.pattern.permute.xlu0 0
  %884 = vperm.xlu0 %883, %v387
  %v885 = vpop.permute.xlu0 %884
  %v887 = vsel %vm846, %v850, 0.0
  %v888 = vsel %vm846, %v855, 0.0
  %v889 = vsel %vm846, %v860, 0.0
  %v890 = vsel %vm846, %v865, 0.0
  %v891 = vsel %vm846, %v870, 0.0
  %v892 = vsel %vm846, %v875, 0.0
  %v893 = vsel %vm846, %v880, 0.0
  %v894 = vsel %vm846, %v885, 0.0
  %vm895 = vcmp.ge.s32.totalorder %v843, 16
  %vm896 = vcmp.lt.s32.totalorder %v843, 32
  %vm897 = vmand %vm895, %vm896
  %898 = vset.pattern.permute.xlu0 1
  %899 = vperm.xlu0 %898, %v352
  %v900 = vpop.permute.xlu0 %899
  %902 = vset.pattern.permute.xlu0 1
  %903 = vperm.xlu0 %902, %v357
  %v904 = vpop.permute.xlu0 %903
  %906 = vset.pattern.permute.xlu0 1
  %907 = vperm.xlu0 %906, %v362
  %v908 = vpop.permute.xlu0 %907
  %910 = vset.pattern.permute.xlu0 1
  %911 = vperm.xlu0 %910, %v367
  %v912 = vpop.permute.xlu0 %911
  %914 = vset.pattern.permute.xlu0 1
  %915 = vperm.xlu0 %914, %v372
  %v916 = vpop.permute.xlu0 %915
  %918 = vset.pattern.permute.xlu0 1
  %919 = vperm.xlu0 %918, %v377
  %v920 = vpop.permute.xlu0 %919
  %922 = vset.pattern.permute.xlu0 1
  %923 = vperm.xlu0 %922, %v382
  %v924 = vpop.permute.xlu0 %923
  %926 = vset.pattern.permute.xlu0 1
  %927 = vperm.xlu0 %926, %v387
  %v928 = vpop.permute.xlu0 %927
  %v930 = vsel %vm897, %v900, %v887
  %v931 = vsel %vm897, %v904, %v888
  %v932 = vsel %vm897, %v908, %v889
  %v933 = vsel %vm897, %v912, %v890
  %v934 = vsel %vm897, %v916, %v891
  %v935 = vsel %vm897, %v920, %v892
  %v936 = vsel %vm897, %v924, %v893
  %v937 = vsel %vm897, %v928, %v894
  %vm938 = vcmask 523264
  %v940 = vsel %vm938, %v827, 0
  %v943 = vsel %vm938, %v829, 0
  %v946 = vsel %vm938, %v831, 0
  %v949 = vsel %vm938, %v833, 0
  %v952 = vsel %vm938, %v835, 0
  %v955 = vsel %vm938, %v837, 0
  %v958 = vsel %vm938, %v839, 0
  %v961 = vsel %vm938, %v841, 0
  %963 = vmatprep.subr.mxu0 0.0
  %964 = vmatpush1.msra.mxu0 %v572
  %965 = vmatprep.subr.mxu0 0.0
  %966 = vmatpush1.msra.mxu0 %v577
  %967 = vmatprep.subr.mxu0 0.0
  %968 = vmatpush1.msra.mxu0 %v582
  %969 = vmatprep.subr.mxu0 0.0
  %970 = vmatpush1.msra.mxu0 %v587
  %971 = vmatprep.subr.mxu0 0.0
  %972 = vmatpush1.msra.mxu0 %v592
  %973 = vmatprep.subr.mxu0 0.0
  %974 = vmatpush1.msra.mxu0 %v597
  %975 = vmatprep.subr.mxu0 0.0
  %976 = vmatpush1.msra.mxu0 %v602
  %977 = vmatprep.subr.mxu0 0.0
  %978 = vmatpush1.msra.mxu0 %v607
  %979 = vmatprep.subr.mxu0 0.0
  %980 = vmatpush1.msra.mxu0 %v680
  %981 = vmatprep.subr.mxu0 0.0
  %982 = vmatpush1.msra.mxu0 %v685
  %983 = vmatprep.subr.mxu0 0.0
  %984 = vmatpush1.msra.mxu0 %v690
  %985 = vmatprep.subr.mxu0 0.0
  %986 = vmatpush1.msra.mxu0 %v695
  %987 = vmatprep.subr.mxu0 0.0
  %988 = vmatpush1.msra.mxu0 %v700
  %989 = vmatprep.subr.mxu0 0.0
  %990 = vmatpush1.msra.mxu0 %v705
  %991 = vmatprep.subr.mxu0 0.0
  %992 = vmatpush1.msra.mxu0 %v710
  %993 = vmatprep.subr.mxu0 0.0
  %994 = vmatpush1.msra.mxu0 %v715
  %995 = vmatprep.subr.mxu0 0.0
  %996 = vmatpush1.msra.mxu0 %v788
  %997 = vmatprep.subr.mxu0 0.0
  %998 = vmatpush1.msra.mxu0 %v793
  %999 = vmatprep.subr.mxu0 0.0
  %1000 = vmatpush1.msra.mxu0 %v798
  %1001 = vmatprep.subr.mxu0 0.0
  %1002 = vmatpush1.msra.mxu0 %v803
  %1003 = vmatprep.subr.mxu0 0.0
  %1004 = vmatpush1.msra.mxu0 %v808
  %1005 = vmatprep.subr.mxu0 0.0
  %1006 = vmatpush1.msra.mxu0 %v813
  %1007 = vmatprep.subr.mxu0 0.0
  %1008 = vmatpush1.msra.mxu0 %v818
  %1009 = vmatprep.subr.mxu0 0.0
  %1010 = vmatpush1.msra.mxu0 %v823
  %1011 = vmatprep.subr.mxu0 0.0
  %1012 = vmatpush1.msra.mxu0 0.0
  %1013 = vmatprep.subr.mxu0 0.0
  %1014 = vmatpush1.msra.mxu0 0.0
  %1015 = vmatprep.subr.mxu0 0.0
  %1016 = vmatpush1.msra.mxu0 0.0
  %1017 = vmatprep.subr.mxu0 0.0
  %1018 = vmatpush1.msra.mxu0 0.0
  %1019 = vmatprep.subr.mxu0 0.0
  %1020 = vmatpush1.msra.mxu0 0.0
  %1021 = vmatprep.subr.mxu0 0.0
  %1022 = vmatpush1.msra.mxu0 0.0
  %1023 = vmatprep.subr.mxu0 0.0
  %1024 = vmatpush1.msra.mxu0 0.0
  %1025 = vmatprep.subr.mxu0 0.0
  %1026 = vmatpush1.msra.mxu0 0.0
  %1027 = vmatprep.mubr.f32.mxu0 %v940
  %1028 = vmatmul.mubr.f32.gmra.mrb[0].mxu0 %v826
  %v1029 = vpop.f32.mrb[0].mxu0
  %v1030 = vadd.f32 %v930, %v1029
  %v1031 = vpop.f32.mrb[0].mxu0
  %1032 = vmatprep.mubr.f32.mxu0 %v943
  %1033 = vmatmul.mubr.f32.gmra.mrb[0].mxu0 %v828
  %v1034 = vpop.f32.mrb[0].mxu0
  %v1035 = vadd.f32 %v931, %v1034
  %v1036 = vpop.f32.mrb[0].mxu0
  %1037 = vmatprep.mubr.f32.mxu0 %v946
  %1038 = vmatmul.mubr.f32.gmra.mrb[0].mxu0 %v830
  %v1039 = vpop.f32.mrb[0].mxu0
  %v1040 = vadd.f32 %v932, %v1039
  %v1041 = vpop.f32.mrb[0].mxu0
  %1042 = vmatprep.mubr.f32.mxu0 %v949
  %1043 = vmatmul.mubr.f32.gmra.mrb[0].mxu0 %v832
  %v1044 = vpop.f32.mrb[0].mxu0
  %v1045 = vadd.f32 %v933, %v1044
  %v1046 = vpop.f32.mrb[0].mxu0
  %1047 = vmatprep.mubr.f32.mxu0 %v952
  %1048 = vmatmul.mubr.f32.gmra.mrb[0].mxu0 %v834
  %v1049 = vpop.f32.mrb[0].mxu0
  %v1050 = vadd.f32 %v934, %v1049
  %v1051 = vpop.f32.mrb[0].mxu0
  %1052 = vmatprep.mubr.f32.mxu0 %v955
  %1053 = vmatmul.mubr.f32.gmra.mrb[0].mxu0 %v836
  %v1054 = vpop.f32.mrb[0].mxu0
  %v1055 = vadd.f32 %v935, %v1054
  %v1056 = vpop.f32.mrb[0].mxu0
  %1057 = vmatprep.mubr.f32.mxu0 %v958
  %1058 = vmatmul.mubr.f32.gmra.mrb[0].mxu0 %v838
  %v1059 = vpop.f32.mrb[0].mxu0
  %v1060 = vadd.f32 %v936, %v1059
  %v1061 = vpop.f32.mrb[0].mxu0
  %1062 = vmatprep.mubr.f32.mxu0 %v961
  %1063 = vmatmul.mubr.f32.gmra.mrb[0].mxu0 %v840
  %v1064 = vpop.f32.mrb[0].mxu0
  %v1065 = vadd.f32 %v937, %v1064
  %v1066 = vpop.f32.mrb[0].mxu0
  %1067 = vdwg.mxu0
  %vm1068 = vcmp.ge.f32.partialorder %v1030, 0.0
  %vm1069 = vcmp.ge.f32.partialorder %v1035, 0.0
  %vm1070 = vcmp.ge.f32.partialorder %v1040, 0.0
  %vm1071 = vcmp.ge.f32.partialorder %v1045, 0.0
  %vm1072 = vcmp.ge.f32.partialorder %v1050, 0.0
  %vm1073 = vcmp.ge.f32.partialorder %v1055, 0.0
  %vm1074 = vcmp.ge.f32.partialorder %v1060, 0.0
  %vm1075 = vcmp.ge.f32.partialorder %v1065, 0.0
  %v1076 = vmul.f32 %v1030, 0.2
  %v1077 = vmul.f32 %v1035, 0.2
  %v1078 = vmul.f32 %v1040, 0.2
  %v1079 = vmul.f32 %v1045, 0.2
  %v1080 = vmul.f32 %v1050, 0.2
  %v1081 = vmul.f32 %v1055, 0.2
  %v1082 = vmul.f32 %v1060, 0.2
  %v1083 = vmul.f32 %v1065, 0.2
  %v1084 = vsel %vm1068, %v1030, %v1076
  %v1085 = vsel %vm1069, %v1035, %v1077
  %v1086 = vsel %vm1070, %v1040, %v1078
  %v1087 = vsel %vm1071, %v1045, %v1079
  %v1088 = vsel %vm1072, %v1050, %v1080
  %v1089 = vsel %vm1073, %v1055, %v1081
  %v1090 = vsel %vm1074, %v1060, %v1082
  %v1091 = vsel %vm1075, %v1065, %v1083
  %v1092 = vld [vmem:[%s4] sm:$0xff]
  %v1093 = vld [vmem:[%s4 + $0x8] sm:$0xff]
  %v1094 = vld [vmem:[%s4 + $0x10] sm:$0xff]
  %v1095 = vld [vmem:[%s4 + $0x18] sm:$0xff]
  %vm1096 = vcmask 261120
  %v1098 = vsel %vm1096, %v1084, 0
  %v1101 = vsel %vm1096, %v1085, 0
  %v1104 = vsel %vm1096, %v1086, 0
  %v1107 = vsel %vm1096, %v1087, 0
  %v1110 = vsel %vm1096, %v1088, 0
  %v1113 = vsel %vm1096, %v1089, 0
  %v1116 = vsel %vm1096, %v1090, 0
  %v1119 = vsel %vm1096, %v1091, 0
  %1121 = vmatprep.subr.mxu0 0.0
  %1122 = vmatpush1.msra.mxu0 %v1092
  %1123 = vmatprep.subr.mxu0 0.0
  %1124 = vmatpush1.msra.mxu0 %v1093
  %1125 = vmatprep.subr.mxu0 0.0
  %1126 = vmatpush1.msra.mxu0 %v1094
  %1127 = vmatprep.subr.mxu0 0.0
  %1128 = vmatpush1.msra.mxu0 %v1095
  %1129 = vmatprep.subr.mxu0 0.0
  %1130 = vmatpush1.msra.mxu0 0.0
  %1131 = vmatprep.subr.mxu0 0.0
  %1132 = vmatpush1.msra.mxu0 0.0
  %1133 = vmatprep.subr.mxu0 0.0
  %1134 = vmatpush1.msra.mxu0 0.0
  %1135 = vmatprep.subr.mxu0 0.0
  %1136 = vmatpush1.msra.mxu0 0.0
  %1137 = vmatprep.subr.mxu0 0.0
  %1138 = vmatpush1.msra.mxu0 0.0
  %1139 = vmatprep.subr.mxu0 0.0
  %1140 = vmatpush1.msra.mxu0 0.0
  %1141 = vmatprep.subr.mxu0 0.0
  %1142 = vmatpush1.msra.mxu0 0.0
  %1143 = vmatprep.subr.mxu0 0.0
  %1144 = vmatpush1.msra.mxu0 0.0
  %1145 = vmatprep.subr.mxu0 0.0
  %1146 = vmatpush1.msra.mxu0 0.0
  %1147 = vmatprep.subr.mxu0 0.0
  %1148 = vmatpush1.msra.mxu0 0.0
  %1149 = vmatprep.subr.mxu0 0.0
  %1150 = vmatpush1.msra.mxu0 0.0
  %1151 = vmatprep.subr.mxu0 0.0
  %1152 = vmatpush1.msra.mxu0 0.0
  %1153 = vmatprep.subr.mxu0 0.0
  %1154 = vmatpush1.msra.mxu0 0.0
  %1155 = vmatprep.subr.mxu0 0.0
  %1156 = vmatpush1.msra.mxu0 0.0
  %1157 = vmatprep.subr.mxu0 0.0
  %1158 = vmatpush1.msra.mxu0 0.0
  %1159 = vmatprep.subr.mxu0 0.0
  %1160 = vmatpush1.msra.mxu0 0.0
  %1161 = vmatprep.subr.mxu0 0.0
  %1162 = vmatpush1.msra.mxu0 0.0
  %1163 = vmatprep.subr.mxu0 0.0
  %1164 = vmatpush1.msra.mxu0 0.0
  %1165 = vmatprep.subr.mxu0 0.0
  %1166 = vmatpush1.msra.mxu0 0.0
  %1167 = vmatprep.subr.mxu0 0.0
  %1168 = vmatpush1.msra.mxu0 0.0
  %1169 = vmatprep.subr.mxu0 0.0
  %1170 = vmatpush1.msra.mxu0 0.0
  %1171 = vmatprep.subr.mxu0 0.0
  %1172 = vmatpush1.msra.mxu0 0.0
  %1173 = vmatprep.subr.mxu0 0.0
  %1174 = vmatpush1.msra.mxu0 0.0
  %1175 = vmatprep.subr.mxu0 0.0
  %1176 = vmatpush1.msra.mxu0 0.0
  %1177 = vmatprep.subr.mxu0 0.0
  %1178 = vmatpush1.msra.mxu0 0.0
  %1179 = vmatprep.subr.mxu0 0.0
  %1180 = vmatpush1.msra.mxu0 0.0
  %1181 = vmatprep.subr.mxu0 0.0
  %1182 = vmatpush1.msra.mxu0 0.0
  %1183 = vmatprep.subr.mxu0 0.0
  %1184 = vmatpush1.msra.mxu0 0.0
  %1185 = vmatprep.mubr.f32.mxu0 0.0
  %1186 = vmatmul.mubr.f32.gmra.mrb[0].mxu0 %v1098
  %v1187 = vpop.f32.mrb[0].mxu0
  %v1188 = vadd.f32 0.0, %v1187
  %v1189 = vpop.f32.mrb[0].mxu0
  %1190 = vmatprep.mubr.f32.mxu0 0.0
  %1191 = vmatmul.mubr.f32.gmra.mrb[0].mxu0 %v1101
  %v1192 = vpop.f32.mrb[0].mxu0
  %v1193 = vadd.f32 0.0, %v1192
  %v1194 = vpop.f32.mrb[0].mxu0
  %1195 = vmatprep.mubr.f32.mxu0 0.0
  %1196 = vmatmul.mubr.f32.gmra.mrb[0].mxu0 %v1104
  %v1197 = vpop.f32.mrb[0].mxu0
  %v1198 = vadd.f32 0.0, %v1197
  %v1199 = vpop.f32.mrb[0].mxu0
  %1200 = vmatprep.mubr.f32.mxu0 0.0
  %1201 = vmatmul.mubr.f32.gmra.mrb[0].mxu0 %v1107
  %v1202 = vpop.f32.mrb[0].mxu0
  %v1203 = vadd.f32 0.0, %v1202
  %v1204 = vpop.f32.mrb[0].mxu0
  %1205 = vmatprep.mubr.f32.mxu0 0.0
  %1206 = vmatmul.mubr.f32.gmra.mrb[0].mxu0 %v1110
  %v1207 = vpop.f32.mrb[0].mxu0
  %v1208 = vadd.f32 0.0, %v1207
  %v1209 = vpop.f32.mrb[0].mxu0
  %1210 = vmatprep.mubr.f32.mxu0 0.0
  %1211 = vmatmul.mubr.f32.gmra.mrb[0].mxu0 %v1113
  %v1212 = vpop.f32.mrb[0].mxu0
  %v1213 = vadd.f32 0.0, %v1212
  %v1214 = vpop.f32.mrb[0].mxu0
  %1215 = vmatprep.mubr.f32.mxu0 0.0
  %1216 = vmatmul.mubr.f32.gmra.mrb[0].mxu0 %v1116
  %v1217 = vpop.f32.mrb[0].mxu0
  %v1218 = vadd.f32 0.0, %v1217
  %v1219 = vpop.f32.mrb[0].mxu0
  %1220 = vmatprep.mubr.f32.mxu0 0.0
  %1221 = vmatmul.mubr.f32.gmra.mrb[0].mxu0 %v1119
  %v1222 = vpop.f32.mrb[0].mxu0
  %v1223 = vadd.f32 0.0, %v1222
  %v1224 = vpop.f32.mrb[0].mxu0
  %1225 = vdwg.mxu0
  %s1226 = scalar_lea.vmem %s4, 32
  %v1227 = vld [vmem:[%s1226] sm:$0xff]
  %v1228 = vld [vmem:[%s1226 + $0x8] sm:$0xff]
  %v1229 = vld [vmem:[%s1226 + $0x10] sm:$0xff]
  %v1230 = vld [vmem:[%s1226 + $0x18] sm:$0xff]
  %1231 = vmatprep.subr.mxu0 0.0
  %1232 = vmatpush1.msra.mxu0 %v1227
  %1233 = vmatprep.subr.mxu0 0.0
  %1234 = vmatpush1.msra.mxu0 %v1228
  %1235 = vmatprep.subr.mxu0 0.0
  %1236 = vmatpush1.msra.mxu0 %v1229
  %1237 = vmatprep.subr.mxu0 0.0
  %1238 = vmatpush1.msra.mxu0 %v1230
  %1239 = vmatprep.subr.mxu0 0.0
  %1240 = vmatpush1.msra.mxu0 0.0
  %1241 = vmatprep.subr.mxu0 0.0
  %1242 = vmatpush1.msra.mxu0 0.0
  %1243 = vmatprep.subr.mxu0 0.0
  %1244 = vmatpush1.msra.mxu0 0.0
  %1245 = vmatprep.subr.mxu0 0.0
  %1246 = vmatpush1.msra.mxu0 0.0
  %1247 = vmatprep.subr.mxu0 0.0
  %1248 = vmatpush1.msra.mxu0 0.0
  %1249 = vmatprep.subr.mxu0 0.0
  %1250 = vmatpush1.msra.mxu0 0.0
  %1251 = vmatprep.subr.mxu0 0.0
  %1252 = vmatpush1.msra.mxu0 0.0
  %1253 = vmatprep.subr.mxu0 0.0
  %1254 = vmatpush1.msra.mxu0 0.0
  %1255 = vmatprep.subr.mxu0 0.0
  %1256 = vmatpush1.msra.mxu0 0.0
  %1257 = vmatprep.subr.mxu0 0.0
  %1258 = vmatpush1.msra.mxu0 0.0
  %1259 = vmatprep.subr.mxu0 0.0
  %1260 = vmatpush1.msra.mxu0 0.0
  %1261 = vmatprep.subr.mxu0 0.0
  %1262 = vmatpush1.msra.mxu0 0.0
  %1263 = vmatprep.subr.mxu0 0.0
  %1264 = vmatpush1.msra.mxu0 0.0
  %1265 = vmatprep.subr.mxu0 0.0
  %1266 = vmatpush1.msra.mxu0 0.0
  %1267 = vmatprep.subr.mxu0 0.0
  %1268 = vmatpush1.msra.mxu0 0.0
  %1269 = vmatprep.subr.mxu0 0.0
  %1270 = vmatpush1.msra.mxu0 0.0
  %1271 = vmatprep.subr.mxu0 0.0
  %1272 = vmatpush1.msra.mxu0 0.0
  %1273 = vmatprep.subr.mxu0 0.0
  %1274 = vmatpush1.msra.mxu0 0.0
  %1275 = vmatprep.subr.mxu0 0.0
  %1276 = vmatpush1.msra.mxu0 0.0
  %1277 = vmatprep.subr.mxu0 0.0
  %1278 = vmatpush1.msra.mxu0 0.0
  %1279 = vmatprep.subr.mxu0 0.0
  %1280 = vmatpush1.msra.mxu0 0.0
  %1281 = vmatprep.subr.mxu0 0.0
  %1282 = vmatpush1.msra.mxu0 0.0
  %1283 = vmatprep.subr.mxu0 0.0
  %1284 = vmatpush1.msra.mxu0 0.0
  %1285 = vmatprep.subr.mxu0 0.0
  %1286 = vmatpush1.msra.mxu0 0.0
  %1287 = vmatprep.subr.mxu0 0.0
  %1288 = vmatpush1.msra.mxu0 0.0
  %1289 = vmatprep.subr.mxu0 0.0
  %1290 = vmatpush1.msra.mxu0 0.0
  %1291 = vmatprep.subr.mxu0 0.0
  %1292 = vmatpush1.msra.mxu0 0.0
  %1293 = vmatprep.subr.mxu0 0.0
  %1294 = vmatpush1.msra.mxu0 0.0
  %1295 = vmatprep.mubr.f32.mxu0 0.0
  %1296 = vmatmul.mubr.f32.gmra.mrb[0].mxu0 %v1098
  %v1297 = vpop.f32.mrb[0].mxu0
  %v1298 = vadd.f32 0.0, %v1297
  %v1299 = vpop.f32.mrb[0].mxu0
  %1300 = vmatprep.mubr.f32.mxu0 0.0
  %1301 = vmatmul.mubr.f32.gmra.mrb[0].mxu0 %v1101
  %v1302 = vpop.f32.mrb[0].mxu0
  %v1303 = vadd.f32 0.0, %v1302
  %v1304 = vpop.f32.mrb[0].mxu0
  %1305 = vmatprep.mubr.f32.mxu0 0.0
  %1306 = vmatmul.mubr.f32.gmra.mrb[0].mxu0 %v1104
  %v1307 = vpop.f32.mrb[0].mxu0
  %v1308 = vadd.f32 0.0, %v1307
  %v1309 = vpop.f32.mrb[0].mxu0
  %1310 = vmatprep.mubr.f32.mxu0 0.0
  %1311 = vmatmul.mubr.f32.gmra.mrb[0].mxu0 %v1107
  %v1312 = vpop.f32.mrb[0].mxu0
  %v1313 = vadd.f32 0.0, %v1312
  %v1314 = vpop.f32.mrb[0].mxu0
  %1315 = vmatprep.mubr.f32.mxu0 0.0
  %1316 = vmatmul.mubr.f32.gmra.mrb[0].mxu0 %v1110
  %v1317 = vpop.f32.mrb[0].mxu0
  %v1318 = vadd.f32 0.0, %v1317
  %v1319 = vpop.f32.mrb[0].mxu0
  %1320 = vmatprep.mubr.f32.mxu0 0.0
  %1321 = vmatmul.mubr.f32.gmra.mrb[0].mxu0 %v1113
  %v1322 = vpop.f32.mrb[0].mxu0
  %v1323 = vadd.f32 0.0, %v1322
  %v1324 = vpop.f32.mrb[0].mxu0
  %1325 = vmatprep.mubr.f32.mxu0 0.0
  %1326 = vmatmul.mubr.f32.gmra.mrb[0].mxu0 %v1116
  %v1327 = vpop.f32.mrb[0].mxu0
  %v1328 = vadd.f32 0.0, %v1327
  %v1329 = vpop.f32.mrb[0].mxu0
  %1330 = vmatprep.mubr.f32.mxu0 0.0
  %1331 = vmatmul.mubr.f32.gmra.mrb[0].mxu0 %v1119
  %v1332 = vpop.f32.mrb[0].mxu0
  %v1333 = vadd.f32 0.0, %v1332
  %v1334 = vpop.f32.mrb[0].mxu0
  %1335 = vdwg.mxu0
  %s1336 = scalar_lea.vmem %s4, 64
  %v1337 = vld [vmem:[%s1336] sm:$0xff]
  %v1338 = vld [vmem:[%s1336 + $0x8] sm:$0xff]
  %v1339 = vld [vmem:[%s1336 + $0x10] sm:$0xff]
  %v1340 = vld [vmem:[%s1336 + $0x18] sm:$0xff]
  %1341 = vmatprep.subr.mxu0 0.0
  %1342 = vmatpush1.msra.mxu0 %v1337
  %1343 = vmatprep.subr.mxu0 0.0
  %1344 = vmatpush1.msra.mxu0 %v1338
  %1345 = vmatprep.subr.mxu0 0.0
  %1346 = vmatpush1.msra.mxu0 %v1339
  %1347 = vmatprep.subr.mxu0 0.0
  %1348 = vmatpush1.msra.mxu0 %v1340
  %1349 = vmatprep.subr.mxu0 0.0
  %1350 = vmatpush1.msra.mxu0 0.0
  %1351 = vmatprep.subr.mxu0 0.0
  %1352 = vmatpush1.msra.mxu0 0.0
  %1353 = vmatprep.subr.mxu0 0.0
  %1354 = vmatpush1.msra.mxu0 0.0
  %1355 = vmatprep.subr.mxu0 0.0
  %1356 = vmatpush1.msra.mxu0 0.0
  %1357 = vmatprep.subr.mxu0 0.0
  %1358 = vmatpush1.msra.mxu0 0.0
  %1359 = vmatprep.subr.mxu0 0.0
  %1360 = vmatpush1.msra.mxu0 0.0
  %1361 = vmatprep.subr.mxu0 0.0
  %1362 = vmatpush1.msra.mxu0 0.0
  %1363 = vmatprep.subr.mxu0 0.0
  %1364 = vmatpush1.msra.mxu0 0.0
  %1365 = vmatprep.subr.mxu0 0.0
  %1366 = vmatpush1.msra.mxu0 0.0
  %1367 = vmatprep.subr.mxu0 0.0
  %1368 = vmatpush1.msra.mxu0 0.0
  %1369 = vmatprep.subr.mxu0 0.0
  %1370 = vmatpush1.msra.mxu0 0.0
  %1371 = vmatprep.subr.mxu0 0.0
  %1372 = vmatpush1.msra.mxu0 0.0
  %1373 = vmatprep.subr.mxu0 0.0
  %1374 = vmatpush1.msra.mxu0 0.0
  %1375 = vmatprep.subr.mxu0 0.0
  %1376 = vmatpush1.msra.mxu0 0.0
  %1377 = vmatprep.subr.mxu0 0.0
  %1378 = vmatpush1.msra.mxu0 0.0
  %1379 = vmatprep.subr.mxu0 0.0
  %1380 = vmatpush1.msra.mxu0 0.0
  %1381 = vmatprep.subr.mxu0 0.0
  %1382 = vmatpush1.msra.mxu0 0.0
  %1383 = vmatprep.subr.mxu0 0.0
  %1384 = vmatpush1.msra.mxu0 0.0
  %1385 = vmatprep.subr.mxu0 0.0
  %1386 = vmatpush1.msra.mxu0 0.0
  %1387 = vmatprep.subr.mxu0 0.0
  %1388 = vmatpush1.msra.mxu0 0.0
  %1389 = vmatprep.subr.mxu0 0.0
  %1390 = vmatpush1.msra.mxu0 0.0
  %1391 = vmatprep.subr.mxu0 0.0
  %1392 = vmatpush1.msra.mxu0 0.0
  %1393 = vmatprep.subr.mxu0 0.0
  %1394 = vmatpush1.msra.mxu0 0.0
  %1395 = vmatprep.subr.mxu0 0.0
  %1396 = vmatpush1.msra.mxu0 0.0
  %1397 = vmatprep.subr.mxu0 0.0
  %1398 = vmatpush1.msra.mxu0 0.0
  %1399 = vmatprep.subr.mxu0 0.0
  %1400 = vmatpush1.msra.mxu0 0.0
  %1401 = vmatprep.subr.mxu0 0.0
  %1402 = vmatpush1.msra.mxu0 0.0
  %1403 = vmatprep.subr.mxu0 0.0
  %1404 = vmatpush1.msra.mxu0 0.0
  %1405 = vmatprep.mubr.f32.mxu0 0.0
  %1406 = vmatmul.mubr.f32.gmra.mrb[0].mxu0 %v1098
  %v1407 = vpop.f32.mrb[0].mxu0
  %v1408 = vadd.f32 0.0, %v1407
  %v1409 = vpop.f32.mrb[0].mxu0
  %1410 = vmatprep.mubr.f32.mxu0 0.0
  %1411 = vmatmul.mubr.f32.gmra.mrb[0].mxu0 %v1101
  %v1412 = vpop.f32.mrb[0].mxu0
  %v1413 = vadd.f32 0.0, %v1412
  %v1414 = vpop.f32.mrb[0].mxu0
  %1415 = vmatprep.mubr.f32.mxu0 0.0
  %1416 = vmatmul.mubr.f32.gmra.mrb[0].mxu0 %v1104
  %v1417 = vpop.f32.mrb[0].mxu0
  %v1418 = vadd.f32 0.0, %v1417
  %v1419 = vpop.f32.mrb[0].mxu0
  %1420 = vmatprep.mubr.f32.mxu0 0.0
  %1421 = vmatmul.mubr.f32.gmra.mrb[0].mxu0 %v1107
  %v1422 = vpop.f32.mrb[0].mxu0
  %v1423 = vadd.f32 0.0, %v1422
  %v1424 = vpop.f32.mrb[0].mxu0
  %1425 = vmatprep.mubr.f32.mxu0 0.0
  %1426 = vmatmul.mubr.f32.gmra.mrb[0].mxu0 %v1110
  %v1427 = vpop.f32.mrb[0].mxu0
  %v1428 = vadd.f32 0.0, %v1427
  %v1429 = vpop.f32.mrb[0].mxu0
  %1430 = vmatprep.mubr.f32.mxu0 0.0
  %1431 = vmatmul.mubr.f32.gmra.mrb[0].mxu0 %v1113
  %v1432 = vpop.f32.mrb[0].mxu0
  %v1433 = vadd.f32 0.0, %v1432
  %v1434 = vpop.f32.mrb[0].mxu0
  %1435 = vmatprep.mubr.f32.mxu0 0.0
  %1436 = vmatmul.mubr.f32.gmra.mrb[0].mxu0 %v1116
  %v1437 = vpop.f32.mrb[0].mxu0
  %v1438 = vadd.f32 0.0, %v1437
  %v1439 = vpop.f32.mrb[0].mxu0
  %1440 = vmatprep.mubr.f32.mxu0 0.0
  %1441 = vmatmul.mubr.f32.gmra.mrb[0].mxu0 %v1119
  %v1442 = vpop.f32.mrb[0].mxu0
  %v1443 = vadd.f32 0.0, %v1442
  %v1444 = vpop.f32.mrb[0].mxu0
  %1445 = vdwg.mxu0
  %s1446 = scalar_lea.vmem %s2, 128
  %v1447 = vld [vmem:[%s1446] sm:$0xff]
  %v1448 = vld [vmem:[%s1446 + $0x8] sm:$0xff]
  %v1449 = vld [vmem:[%s1446 + $0x10] sm:$0xff]
  %v1450 = vld [vmem:[%s1446 + $0x18] sm:$0xff]
  %v1451 = vld [vmem:[%s1446 + $0x20] sm:$0xff]
  %v1452 = vld [vmem:[%s1446 + $0x28] sm:$0xff]
  %v1453 = vld [vmem:[%s1446 + $0x30] sm:$0xff]
  %v1454 = vld [vmem:[%s1446 + $0x38] sm:$0xff]
  %v1455 = vld [vmem:[%s1446 + $0x40] sm:$0xff]
  %v1456 = vld [vmem:[%s1446 + $0x48] sm:$0xff]
  %v1457 = vld [vmem:[%s1446 + $0x50] sm:$0xff]
  %v1458 = vld [vmem:[%s1446 + $0x58] sm:$0xff]
  %v1459 = vld [vmem:[%s1446 + $0x60] sm:$0xff]
  %v1460 = vld [vmem:[%s1446 + $0x68] sm:$0xff]
  %v1461 = vld [vmem:[%s1446 + $0x70] sm:$0xff]
  %v1462 = vld [vmem:[%s1446 + $0x78] sm:$0xff]
  %vm1463 = vmand %vm844, %vm896
  %1465 = vset.pattern.permute.xlu0 0
  %1466 = vperm.xlu0 %1465, %v392
  %v1467 = vpop.permute.xlu0 %1466
  %1470 = vset.pattern.permute.xlu0 0
  %1471 = vperm.xlu0 %1470, %v397
  %v1472 = vpop.permute.xlu0 %1471
  %1475 = vset.pattern.permute.xlu0 0
  %1476 = vperm.xlu0 %1475, %v402
  %v1477 = vpop.permute.xlu0 %1476
  %1480 = vset.pattern.permute.xlu0 0
  %1481 = vperm.xlu0 %1480, %v407
  %v1482 = vpop.permute.xlu0 %1481
  %1485 = vset.pattern.permute.xlu0 0
  %1486 = vperm.xlu0 %1485, %v412
  %v1487 = vpop.permute.xlu0 %1486
  %1490 = vset.pattern.permute.xlu0 0
  %1491 = vperm.xlu0 %1490, %v417
  %v1492 = vpop.permute.xlu0 %1491
  %1495 = vset.pattern.permute.xlu0 0
  %1496 = vperm.xlu0 %1495, %v422
  %v1497 = vpop.permute.xlu0 %1496
  %1500 = vset.pattern.permute.xlu0 0
  %1501 = vperm.xlu0 %1500, %v427
  %v1502 = vpop.permute.xlu0 %1501
  %v1504 = vsel %vm1463, %v1467, 0.0
  %v1505 = vsel %vm1463, %v1472, 0.0
  %v1506 = vsel %vm1463, %v1477, 0.0
  %v1507 = vsel %vm1463, %v1482, 0.0
  %v1508 = vsel %vm1463, %v1487, 0.0
  %v1509 = vsel %vm1463, %v1492, 0.0
  %v1510 = vsel %vm1463, %v1497, 0.0
  %v1511 = vsel %vm1463, %v1502, 0.0
  %vm1512 = vcmp.ge.s32.totalorder %v843, 32
  %vm1513 = vcmp.lt.s32.totalorder %v843, 64
  %vm1514 = vmand %vm1512, %vm1513
  %1515 = vset.pattern.permute.xlu0 1
  %1516 = vperm.xlu0 %1515, %v392
  %v1517 = vpop.permute.xlu0 %1516
  %1519 = vset.pattern.permute.xlu0 1
  %1520 = vperm.xlu0 %1519, %v397
  %v1521 = vpop.permute.xlu0 %1520
  %1523 = vset.pattern.permute.xlu0 1
  %1524 = vperm.xlu0 %1523, %v402
  %v1525 = vpop.permute.xlu0 %1524
  %1527 = vset.pattern.permute.xlu0 1
  %1528 = vperm.xlu0 %1527, %v407
  %v1529 = vpop.permute.xlu0 %1528
  %1531 = vset.pattern.permute.xlu0 1
  %1532 = vperm.xlu0 %1531, %v412
  %v1533 = vpop.permute.xlu0 %1532
  %1535 = vset.pattern.permute.xlu0 1
  %1536 = vperm.xlu0 %1535, %v417
  %v1537 = vpop.permute.xlu0 %1536
  %1539 = vset.pattern.permute.xlu0 1
  %1540 = vperm.xlu0 %1539, %v422
  %v1541 = vpop.permute.xlu0 %1540
  %1543 = vset.pattern.permute.xlu0 1
  %1544 = vperm.xlu0 %1543, %v427
  %v1545 = vpop.permute.xlu0 %1544
  %v1547 = vsel %vm1514, %v1517, %v1504
  %v1548 = vsel %vm1514, %v1521, %v1505
  %v1549 = vsel %vm1514, %v1525, %v1506
  %v1550 = vsel %vm1514, %v1529, %v1507
  %v1551 = vsel %vm1514, %v1533, %v1508
  %v1552 = vsel %vm1514, %v1537, %v1509
  %v1553 = vsel %vm1514, %v1541, %v1510
  %v1554 = vsel %vm1514, %v1545, %v1511
  %v1556 = vsel %vm938, %v1448, 0
  %v1559 = vsel %vm938, %v1450, 0
  %v1562 = vsel %vm938, %v1452, 0
  %v1565 = vsel %vm938, %v1454, 0
  %v1568 = vsel %vm938, %v1456, 0
  %v1571 = vsel %vm938, %v1458, 0
  %v1574 = vsel %vm938, %v1460, 0
  %v1577 = vsel %vm938, %v1462, 0
  %1579 = vmatprep.subr.mxu0 0.0
  %1580 = vmatpush1.msra.mxu0 %v1188
  %1581 = vmatprep.subr.mxu0 0.0
  %1582 = vmatpush1.msra.mxu0 %v1193
  %1583 = vmatprep.subr.mxu0 0.0
  %1584 = vmatpush1.msra.mxu0 %v1198
  %1585 = vmatprep.subr.mxu0 0.0
  %1586 = vmatpush1.msra.mxu0 %v1203
  %1587 = vmatprep.subr.mxu0 0.0
  %1588 = vmatpush1.msra.mxu0 %v1208
  %1589 = vmatprep.subr.mxu0 0.0
  %1590 = vmatpush1.msra.mxu0 %v1213
  %1591 = vmatprep.subr.mxu0 0.0
  %1592 = vmatpush1.msra.mxu0 %v1218
  %1593 = vmatprep.subr.mxu0 0.0
  %1594 = vmatpush1.msra.mxu0 %v1223
  %1595 = vmatprep.subr.mxu0 0.0
  %1596 = vmatpush1.msra.mxu0 %v1298
  %1597 = vmatprep.subr.mxu0 0.0
  %1598 = vmatpush1.msra.mxu0 %v1303
  %1599 = vmatprep.subr.mxu0 0.0
  %1600 = vmatpush1.msra.mxu0 %v1308
  %1601 = vmatprep.subr.mxu0 0.0
  %1602 = vmatpush1.msra.mxu0 %v1313
  %1603 = vmatprep.subr.mxu0 0.0
  %1604 = vmatpush1.msra.mxu0 %v1318
  %1605 = vmatprep.subr.mxu0 0.0
  %1606 = vmatpush1.msra.mxu0 %v1323
  %1607 = vmatprep.subr.mxu0 0.0
  %1608 = vmatpush1.msra.mxu0 %v1328
  %1609 = vmatprep.subr.mxu0 0.0
  %1610 = vmatpush1.msra.mxu0 %v1333
  %1611 = vmatprep.subr.mxu0 0.0
  %1612 = vmatpush1.msra.mxu0 %v1408
  %1613 = vmatprep.subr.mxu0 0.0
  %1614 = vmatpush1.msra.mxu0 %v1413
  %1615 = vmatprep.subr.mxu0 0.0
  %1616 = vmatpush1.msra.mxu0 %v1418
  %1617 = vmatprep.subr.mxu0 0.0
  %1618 = vmatpush1.msra.mxu0 %v1423
  %1619 = vmatprep.subr.mxu0 0.0
  %1620 = vmatpush1.msra.mxu0 %v1428
  %1621 = vmatprep.subr.mxu0 0.0
  %1622 = vmatpush1.msra.mxu0 %v1433
  %1623 = vmatprep.subr.mxu0 0.0
  %1624 = vmatpush1.msra.mxu0 %v1438
  %1625 = vmatprep.subr.mxu0 0.0
  %1626 = vmatpush1.msra.mxu0 %v1443
  %1627 = vmatprep.subr.mxu0 0.0
  %1628 = vmatpush1.msra.mxu0 0.0
  %1629 = vmatprep.subr.mxu0 0.0
  %1630 = vmatpush1.msra.mxu0 0.0
  %1631 = vmatprep.subr.mxu0 0.0
  %1632 = vmatpush1.msra.mxu0 0.0
  %1633 = vmatprep.subr.mxu0 0.0
  %1634 = vmatpush1.msra.mxu0 0.0
  %1635 = vmatprep.subr.mxu0 0.0
  %1636 = vmatpush1.msra.mxu0 0.0
  %1637 = vmatprep.subr.mxu0 0.0
  %1638 = vmatpush1.msra.mxu0 0.0
  %1639 = vmatprep.subr.mxu0 0.0
  %1640 = vmatpush1.msra.mxu0 0.0
  %1641 = vmatprep.subr.mxu0 0.0
  %1642 = vmatpush1.msra.mxu0 0.0
  %1643 = vmatprep.mubr.f32.mxu0 %v1556
  %1644 = vmatmul.mubr.f32.gmra.mrb[0].mxu0 %v1447
  %v1645 = vpop.f32.mrb[0].mxu0
  %v1646 = vadd.f32 %v1547, %v1645
  %v1647 = vpop.f32.mrb[0].mxu0
  %1648 = vmatprep.mubr.f32.mxu0 %v1559
  %1649 = vmatmul.mubr.f32.gmra.mrb[0].mxu0 %v1449
  %v1650 = vpop.f32.mrb[0].mxu0
  %v1651 = vadd.f32 %v1548, %v1650
  %v1652 = vpop.f32.mrb[0].mxu0
  %1653 = vmatprep.mubr.f32.mxu0 %v1562
  %1654 = vmatmul.mubr.f32.gmra.mrb[0].mxu0 %v1451
  %v1655 = vpop.f32.mrb[0].mxu0
  %v1656 = vadd.f32 %v1549, %v1655
  %v1657 = vpop.f32.mrb[0].mxu0
  %1658 = vmatprep.mubr.f32.mxu0 %v1565
  %1659 = vmatmul.mubr.f32.gmra.mrb[0].mxu0 %v1453
  %v1660 = vpop.f32.mrb[0].mxu0
  %v1661 = vadd.f32 %v1550, %v1660
  %v1662 = vpop.f32.mrb[0].mxu0
  %1663 = vmatprep.mubr.f32.mxu0 %v1568
  %1664 = vmatmul.mubr.f32.gmra.mrb[0].mxu0 %v1455
  %v1665 = vpop.f32.mrb[0].mxu0
  %v1666 = vadd.f32 %v1551, %v1665
  %v1667 = vpop.f32.mrb[0].mxu0
  %1668 = vmatprep.mubr.f32.mxu0 %v1571
  %1669 = vmatmul.mubr.f32.gmra.mrb[0].mxu0 %v1457
  %v1670 = vpop.f32.mrb[0].mxu0
  %v1671 = vadd.f32 %v1552, %v1670
  %v1672 = vpop.f32.mrb[0].mxu0
  %1673 = vmatprep.mubr.f32.mxu0 %v1574
  %1674 = vmatmul.mubr.f32.gmra.mrb[0].mxu0 %v1459
  %v1675 = vpop.f32.mrb[0].mxu0
  %v1676 = vadd.f32 %v1553, %v1675
  %v1677 = vpop.f32.mrb[0].mxu0
  %1678 = vmatprep.mubr.f32.mxu0 %v1577
  %1679 = vmatmul.mubr.f32.gmra.mrb[0].mxu0 %v1461
  %v1680 = vpop.f32.mrb[0].mxu0
  %v1681 = vadd.f32 %v1554, %v1680
  %v1682 = vpop.f32.mrb[0].mxu0
  %1683 = vdwg.mxu0
  %vm1684 = vcmp.ge.f32.partialorder %v1646, 0.0
  %vm1685 = vcmp.ge.f32.partialorder %v1651, 0.0
  %vm1686 = vcmp.ge.f32.partialorder %v1656, 0.0
  %vm1687 = vcmp.ge.f32.partialorder %v1661, 0.0
  %vm1688 = vcmp.ge.f32.partialorder %v1666, 0.0
  %vm1689 = vcmp.ge.f32.partialorder %v1671, 0.0
  %vm1690 = vcmp.ge.f32.partialorder %v1676, 0.0
  %vm1691 = vcmp.ge.f32.partialorder %v1681, 0.0
  %v1692 = vmul.f32 %v1646, 0.2
  %v1693 = vmul.f32 %v1651, 0.2
  %v1694 = vmul.f32 %v1656, 0.2
  %v1695 = vmul.f32 %v1661, 0.2
  %v1696 = vmul.f32 %v1666, 0.2
  %v1697 = vmul.f32 %v1671, 0.2
  %v1698 = vmul.f32 %v1676, 0.2
  %v1699 = vmul.f32 %v1681, 0.2
  %v1700 = vsel %vm1684, %v1646, %v1692
  %v1701 = vsel %vm1685, %v1651, %v1693
  %v1702 = vsel %vm1686, %v1656, %v1694
  %v1703 = vsel %vm1687, %v1661, %v1695
  %v1704 = vsel %vm1688, %v1666, %v1696
  %v1705 = vsel %vm1689, %v1671, %v1697
  %v1706 = vsel %vm1690, %v1676, %v1698
  %v1707 = vsel %vm1691, %v1681, %v1699
  %v1708 = vld [vmem:[%s5] sm:$0xff]
  %v1709 = vld [vmem:[%s5 + $0x8] sm:$0xff]
  %v1710 = vld [vmem:[%s5 + $0x10] sm:$0xff]
  %v1711 = vld [vmem:[%s5 + $0x18] sm:$0xff]
  %v1712 = vld [vmem:[%s5 + $0x20] sm:$0xff]
  %v1713 = vld [vmem:[%s5 + $0x28] sm:$0xff]
  %v1714 = vld [vmem:[%s5 + $0x30] sm:$0xff]
  %v1715 = vld [vmem:[%s5 + $0x38] sm:$0xff]
  %v1717 = vsel %vm938, %v1700, 0
  %v1720 = vsel %vm938, %v1701, 0
  %v1723 = vsel %vm938, %v1702, 0
  %v1726 = vsel %vm938, %v1703, 0
  %v1729 = vsel %vm938, %v1704, 0
  %v1732 = vsel %vm938, %v1705, 0
  %v1735 = vsel %vm938, %v1706, 0
  %v1738 = vsel %vm938, %v1707, 0
  %1740 = vmatprep.subr.mxu0 0.0
  %1741 = vmatpush1.msra.mxu0 %v1708
  %1742 = vmatprep.subr.mxu0 0.0
  %1743 = vmatpush1.msra.mxu0 %v1709
  %1744 = vmatprep.subr.mxu0 0.0
  %1745 = vmatpush1.msra.mxu0 %v1710
  %1746 = vmatprep.subr.mxu0 0.0
  %1747 = vmatpush1.msra.mxu0 %v1711
  %1748 = vmatprep.subr.mxu0 0.0
  %1749 = vmatpush1.msra.mxu0 %v1712
  %1750 = vmatprep.subr.mxu0 0.0
  %1751 = vmatpush1.msra.mxu0 %v1713
  %1752 = vmatprep.subr.mxu0 0.0
  %1753 = vmatpush1.msra.mxu0 %v1714
  %1754 = vmatprep.subr.mxu0 0.0
  %1755 = vmatpush1.msra.mxu0 %v1715
  %1756 = vmatprep.subr.mxu0 0.0
  %1757 = vmatpush1.msra.mxu0 0.0
  %1758 = vmatprep.subr.mxu0 0.0
  %1759 = vmatpush1.msra.mxu0 0.0
  %1760 = vmatprep.subr.mxu0 0.0
  %1761 = vmatpush1.msra.mxu0 0.0
  %1762 = vmatprep.subr.mxu0 0.0
  %1763 = vmatpush1.msra.mxu0 0.0
  %1764 = vmatprep.subr.mxu0 0.0
  %1765 = vmatpush1.msra.mxu0 0.0
  %1766 = vmatprep.subr.mxu0 0.0
  %1767 = vmatpush1.msra.mxu0 0.0
  %1768 = vmatprep.subr.mxu0 0.0
  %1769 = vmatpush1.msra.mxu0 0.0
  %1770 = vmatprep.subr.mxu0 0.0
  %1771 = vmatpush1.msra.mxu0 0.0
  %1772 = vmatprep.subr.mxu0 0.0
  %1773 = vmatpush1.msra.mxu0 0.0
  %1774 = vmatprep.subr.mxu0 0.0
  %1775 = vmatpush1.msra.mxu0 0.0
  %1776 = vmatprep.subr.mxu0 0.0
  %1777 = vmatpush1.msra.mxu0 0.0
  %1778 = vmatprep.subr.mxu0 0.0
  %1779 = vmatpush1.msra.mxu0 0.0
  %1780 = vmatprep.subr.mxu0 0.0
  %1781 = vmatpush1.msra.mxu0 0.0
  %1782 = vmatprep.subr.mxu0 0.0
  %1783 = vmatpush1.msra.mxu0 0.0
  %1784 = vmatprep.subr.mxu0 0.0
  %1785 = vmatpush1.msra.mxu0 0.0
  %1786 = vmatprep.subr.mxu0 0.0
  %1787 = vmatpush1.msra.mxu0 0.0
  %1788 = vmatprep.subr.mxu0 0.0
  %1789 = vmatpush1.msra.mxu0 0.0
  %1790 = vmatprep.subr.mxu0 0.0
  %1791 = vmatpush1.msra.mxu0 0.0
  %1792 = vmatprep.subr.mxu0 0.0
  %1793 = vmatpush1.msra.mxu0 0.0
  %1794 = vmatprep.subr.mxu0 0.0
  %1795 = vmatpush1.msra.mxu0 0.0
  %1796 = vmatprep.subr.mxu0 0.0
  %1797 = vmatpush1.msra.mxu0 0.0
  %1798 = vmatprep.subr.mxu0 0.0
  %1799 = vmatpush1.msra.mxu0 0.0
  %1800 = vmatprep.subr.mxu0 0.0
  %1801 = vmatpush1.msra.mxu0 0.0
  %1802 = vmatprep.subr.mxu0 0.0
  %1803 = vmatpush1.msra.mxu0 0.0
  %1804 = vmatprep.mubr.f32.mxu0 0.0
  %1805 = vmatmul.mubr.f32.gmra.mrb[0].mxu0 %v1717
  %v1806 = vpop.f32.mrb[0].mxu0
  %v1807 = vadd.f32 0.0, %v1806
  %v1808 = vpop.f32.mrb[0].mxu0
  %1809 = vmatprep.mubr.f32.mxu0 0.0
  %1810 = vmatmul.mubr.f32.gmra.mrb[0].mxu0 %v1720
  %v1811 = vpop.f32.mrb[0].mxu0
  %v1812 = vadd.f32 0.0, %v1811
  %v1813 = vpop.f32.mrb[0].mxu0
  %1814 = vmatprep.mubr.f32.mxu0 0.0
  %1815 = vmatmul.mubr.f32.gmra.mrb[0].mxu0 %v1723
  %v1816 = vpop.f32.mrb[0].mxu0
  %v1817 = vadd.f32 0.0, %v1816
  %v1818 = vpop.f32.mrb[0].mxu0
  %1819 = vmatprep.mubr.f32.mxu0 0.0
  %1820 = vmatmul.mubr.f32.gmra.mrb[0].mxu0 %v1726
  %v1821 = vpop.f32.mrb[0].mxu0
  %v1822 = vadd.f32 0.0, %v1821
  %v1823 = vpop.f32.mrb[0].mxu0
  %1824 = vmatprep.mubr.f32.mxu0 0.0
  %1825 = vmatmul.mubr.f32.gmra.mrb[0].mxu0 %v1729
  %v1826 = vpop.f32.mrb[0].mxu0
  %v1827 = vadd.f32 0.0, %v1826
  %v1828 = vpop.f32.mrb[0].mxu0
  %1829 = vmatprep.mubr.f32.mxu0 0.0
  %1830 = vmatmul.mubr.f32.gmra.mrb[0].mxu0 %v1732
  %v1831 = vpop.f32.mrb[0].mxu0
  %v1832 = vadd.f32 0.0, %v1831
  %v1833 = vpop.f32.mrb[0].mxu0
  %1834 = vmatprep.mubr.f32.mxu0 0.0
  %1835 = vmatmul.mubr.f32.gmra.mrb[0].mxu0 %v1735
  %v1836 = vpop.f32.mrb[0].mxu0
  %v1837 = vadd.f32 0.0, %v1836
  %v1838 = vpop.f32.mrb[0].mxu0
  %1839 = vmatprep.mubr.f32.mxu0 0.0
  %1840 = vmatmul.mubr.f32.gmra.mrb[0].mxu0 %v1738
  %v1841 = vpop.f32.mrb[0].mxu0
  %v1842 = vadd.f32 0.0, %v1841
  %v1843 = vpop.f32.mrb[0].mxu0
  %1844 = vdwg.mxu0
  %s1845 = scalar_lea.vmem %s5, 64
  %v1846 = vld [vmem:[%s1845] sm:$0xff]
  %v1847 = vld [vmem:[%s1845 + $0x8] sm:$0xff]
  %v1848 = vld [vmem:[%s1845 + $0x10] sm:$0xff]
  %v1849 = vld [vmem:[%s1845 + $0x18] sm:$0xff]
  %v1850 = vld [vmem:[%s1845 + $0x20] sm:$0xff]
  %v1851 = vld [vmem:[%s1845 + $0x28] sm:$0xff]
  %v1852 = vld [vmem:[%s1845 + $0x30] sm:$0xff]
  %v1853 = vld [vmem:[%s1845 + $0x38] sm:$0xff]
  %1854 = vmatprep.subr.mxu0 0.0
  %1855 = vmatpush1.msra.mxu0 %v1846
  %1856 = vmatprep.subr.mxu0 0.0
  %1857 = vmatpush1.msra.mxu0 %v1847
  %1858 = vmatprep.subr.mxu0 0.0
  %1859 = vmatpush1.msra.mxu0 %v1848
  %1860 = vmatprep.subr.mxu0 0.0
  %1861 = vmatpush1.msra.mxu0 %v1849
  %1862 = vmatprep.subr.mxu0 0.0
  %1863 = vmatpush1.msra.mxu0 %v1850
  %1864 = vmatprep.subr.mxu0 0.0
  %1865 = vmatpush1.msra.mxu0 %v1851
  %1866 = vmatprep.subr.mxu0 0.0
  %1867 = vmatpush1.msra.mxu0 %v1852
  %1868 = vmatprep.subr.mxu0 0.0
  %1869 = vmatpush1.msra.mxu0 %v1853
  %1870 = vmatprep.subr.mxu0 0.0
  %1871 = vmatpush1.msra.mxu0 0.0
  %1872 = vmatprep.subr.mxu0 0.0
  %1873 = vmatpush1.msra.mxu0 0.0
  %1874 = vmatprep.subr.mxu0 0.0
  %1875 = vmatpush1.msra.mxu0 0.0
  %1876 = vmatprep.subr.mxu0 0.0
  %1877 = vmatpush1.msra.mxu0 0.0
  %1878 = vmatprep.subr.mxu0 0.0
  %1879 = vmatpush1.msra.mxu0 0.0
  %1880 = vmatprep.subr.mxu0 0.0
  %1881 = vmatpush1.msra.mxu0 0.0
  %1882 = vmatprep.subr.mxu0 0.0
  %1883 = vmatpush1.msra.mxu0 0.0
  %1884 = vmatprep.subr.mxu0 0.0
  %1885 = vmatpush1.msra.mxu0 0.0
  %1886 = vmatprep.subr.mxu0 0.0
  %1887 = vmatpush1.msra.mxu0 0.0
  %1888 = vmatprep.subr.mxu0 0.0
  %1889 = vmatpush1.msra.mxu0 0.0
  %1890 = vmatprep.subr.mxu0 0.0
  %1891 = vmatpush1.msra.mxu0 0.0
  %1892 = vmatprep.subr.mxu0 0.0
  %1893 = vmatpush1.msra.mxu0 0.0
  %1894 = vmatprep.subr.mxu0 0.0
  %1895 = vmatpush1.msra.mxu0 0.0
  %1896 = vmatprep.subr.mxu0 0.0
  %1897 = vmatpush1.msra.mxu0 0.0
  %1898 = vmatprep.subr.mxu0 0.0
  %1899 = vmatpush1.msra.mxu0 0.0
  %1900 = vmatprep.subr.mxu0 0.0
  %1901 = vmatpush1.msra.mxu0 0.0
  %1902 = vmatprep.subr.mxu0 0.0
  %1903 = vmatpush1.msra.mxu0 0.0
  %1904 = vmatprep.subr.mxu0 0.0
  %1905 = vmatpush1.msra.mxu0 0.0
  %1906 = vmatprep.subr.mxu0 0.0
  %1907 = vmatpush1.msra.mxu0 0.0
  %1908 = vmatprep.subr.mxu0 0.0
  %1909 = vmatpush1.msra.mxu0 0.0
  %1910 = vmatprep.subr.mxu0 0.0
  %1911 = vmatpush1.msra.mxu0 0.0
  %1912 = vmatprep.subr.mxu0 0.0
  %1913 = vmatpush1.msra.mxu0 0.0
  %1914 = vmatprep.subr.mxu0 0.0
  %1915 = vmatpush1.msra.mxu0 0.0
  %1916 = vmatprep.subr.mxu0 0.0
  %1917 = vmatpush1.msra.mxu0 0.0
  %1918 = vmatprep.mubr.f32.mxu0 0.0
  %1919 = vmatmul.mubr.f32.gmra.mrb[0].mxu0 %v1717
  %v1920 = vpop.f32.mrb[0].mxu0
  %v1921 = vadd.f32 0.0, %v1920
  %v1922 = vpop.f32.mrb[0].mxu0
  %1923 = vmatprep.mubr.f32.mxu0 0.0
  %1924 = vmatmul.mubr.f32.gmra.mrb[0].mxu0 %v1720
  %v1925 = vpop.f32.mrb[0].mxu0
  %v1926 = vadd.f32 0.0, %v1925
  %v1927 = vpop.f32.mrb[0].mxu0
  %1928 = vmatprep.mubr.f32.mxu0 0.0
  %1929 = vmatmul.mubr.f32.gmra.mrb[0].mxu0 %v1723
  %v1930 = vpop.f32.mrb[0].mxu0
  %v1931 = vadd.f32 0.0, %v1930
  %v1932 = vpop.f32.mrb[0].mxu0
  %1933 = vmatprep.mubr.f32.mxu0 0.0
  %1934 = vmatmul.mubr.f32.gmra.mrb[0].mxu0 %v1726
  %v1935 = vpop.f32.mrb[0].mxu0
  %v1936 = vadd.f32 0.0, %v1935
  %v1937 = vpop.f32.mrb[0].mxu0
  %1938 = vmatprep.mubr.f32.mxu0 0.0
  %1939 = vmatmul.mubr.f32.gmra.mrb[0].mxu0 %v1729
  %v1940 = vpop.f32.mrb[0].mxu0
  %v1941 = vadd.f32 0.0, %v1940
  %v1942 = vpop.f32.mrb[0].mxu0
  %1943 = vmatprep.mubr.f32.mxu0 0.0
  %1944 = vmatmul.mubr.f32.gmra.mrb[0].mxu0 %v1732
  %v1945 = vpop.f32.mrb[0].mxu0
  %v1946 = vadd.f32 0.0, %v1945
  %v1947 = vpop.f32.mrb[0].mxu0
  %1948 = vmatprep.mubr.f32.mxu0 0.0
  %1949 = vmatmul.mubr.f32.gmra.mrb[0].mxu0 %v1735
  %v1950 = vpop.f32.mrb[0].mxu0
  %v1951 = vadd.f32 0.0, %v1950
  %v1952 = vpop.f32.mrb[0].mxu0
  %1953 = vmatprep.mubr.f32.mxu0 0.0
  %1954 = vmatmul.mubr.f32.gmra.mrb[0].mxu0 %v1738
  %v1955 = vpop.f32.mrb[0].mxu0
  %v1956 = vadd.f32 0.0, %v1955
  %v1957 = vpop.f32.mrb[0].mxu0
  %1958 = vdwg.mxu0
  %s1959 = scalar_lea.vmem %s5, 128
  %v1960 = vld [vmem:[%s1959] sm:$0xff]
  %v1961 = vld [vmem:[%s1959 + $0x8] sm:$0xff]
  %v1962 = vld [vmem:[%s1959 + $0x10] sm:$0xff]
  %v1963 = vld [vmem:[%s1959 + $0x18] sm:$0xff]
  %v1964 = vld [vmem:[%s1959 + $0x20] sm:$0xff]
  %v1965 = vld [vmem:[%s1959 + $0x28] sm:$0xff]
  %v1966 = vld [vmem:[%s1959 + $0x30] sm:$0xff]
  %v1967 = vld [vmem:[%s1959 + $0x38] sm:$0xff]
  %1968 = vmatprep.subr.mxu0 0.0
  %1969 = vmatpush1.msra.mxu0 %v1960
  %1970 = vmatprep.subr.mxu0 0.0
  %1971 = vmatpush1.msra.mxu0 %v1961
  %1972 = vmatprep.subr.mxu0 0.0
  %1973 = vmatpush1.msra.mxu0 %v1962
  %1974 = vmatprep.subr.mxu0 0.0
  %1975 = vmatpush1.msra.mxu0 %v1963
  %1976 = vmatprep.subr.mxu0 0.0
  %1977 = vmatpush1.msra.mxu0 %v1964
  %1978 = vmatprep.subr.mxu0 0.0
  %1979 = vmatpush1.msra.mxu0 %v1965
  %1980 = vmatprep.subr.mxu0 0.0
  %1981 = vmatpush1.msra.mxu0 %v1966
  %1982 = vmatprep.subr.mxu0 0.0
  %1983 = vmatpush1.msra.mxu0 %v1967
  %1984 = vmatprep.subr.mxu0 0.0
  %1985 = vmatpush1.msra.mxu0 0.0
  %1986 = vmatprep.subr.mxu0 0.0
  %1987 = vmatpush1.msra.mxu0 0.0
  %1988 = vmatprep.subr.mxu0 0.0
  %1989 = vmatpush1.msra.mxu0 0.0
  %1990 = vmatprep.subr.mxu0 0.0
  %1991 = vmatpush1.msra.mxu0 0.0
  %1992 = vmatprep.subr.mxu0 0.0
  %1993 = vmatpush1.msra.mxu0 0.0
  %1994 = vmatprep.subr.mxu0 0.0
  %1995 = vmatpush1.msra.mxu0 0.0
  %1996 = vmatprep.subr.mxu0 0.0
  %1997 = vmatpush1.msra.mxu0 0.0
  %1998 = vmatprep.subr.mxu0 0.0
  %1999 = vmatpush1.msra.mxu0 0.0
  %2000 = vmatprep.subr.mxu0 0.0
  %2001 = vmatpush1.msra.mxu0 0.0
  %2002 = vmatprep.subr.mxu0 0.0
  %2003 = vmatpush1.msra.mxu0 0.0
  %2004 = vmatprep.subr.mxu0 0.0
  %2005 = vmatpush1.msra.mxu0 0.0
  %2006 = vmatprep.subr.mxu0 0.0
  %2007 = vmatpush1.msra.mxu0 0.0
  %2008 = vmatprep.subr.mxu0 0.0
  %2009 = vmatpush1.msra.mxu0 0.0
  %2010 = vmatprep.subr.mxu0 0.0
  %2011 = vmatpush1.msra.mxu0 0.0
  %2012 = vmatprep.subr.mxu0 0.0
  %2013 = vmatpush1.msra.mxu0 0.0
  %2014 = vmatprep.subr.mxu0 0.0
  %2015 = vmatpush1.msra.mxu0 0.0
  %2016 = vmatprep.subr.mxu0 0.0
  %2017 = vmatpush1.msra.mxu0 0.0
  %2018 = vmatprep.subr.mxu0 0.0
  %2019 = vmatpush1.msra.mxu0 0.0
  %2020 = vmatprep.subr.mxu0 0.0
  %2021 = vmatpush1.msra.mxu0 0.0
  %2022 = vmatprep.subr.mxu0 0.0
  %2023 = vmatpush1.msra.mxu0 0.0
  %2024 = vmatprep.subr.mxu0 0.0
  %2025 = vmatpush1.msra.mxu0 0.0
  %2026 = vmatprep.subr.mxu0 0.0
  %2027 = vmatpush1.msra.mxu0 0.0
  %2028 = vmatprep.subr.mxu0 0.0
  %2029 = vmatpush1.msra.mxu0 0.0
  %2030 = vmatprep.subr.mxu0 0.0
  %2031 = vmatpush1.msra.mxu0 0.0
  %2032 = vmatprep.mubr.f32.mxu0 0.0
  %2033 = vmatmul.mubr.f32.gmra.mrb[0].mxu0 %v1717
  %v2034 = vpop.f32.mrb[0].mxu0
  %v2035 = vadd.f32 0.0, %v2034
  %v2036 = vpop.f32.mrb[0].mxu0
  %2037 = vmatprep.mubr.f32.mxu0 0.0
  %2038 = vmatmul.mubr.f32.gmra.mrb[0].mxu0 %v1720
  %v2039 = vpop.f32.mrb[0].mxu0
  %v2040 = vadd.f32 0.0, %v2039
  %v2041 = vpop.f32.mrb[0].mxu0
  %2042 = vmatprep.mubr.f32.mxu0 0.0
  %2043 = vmatmul.mubr.f32.gmra.mrb[0].mxu0 %v1723
  %v2044 = vpop.f32.mrb[0].mxu0
  %v2045 = vadd.f32 0.0, %v2044
  %v2046 = vpop.f32.mrb[0].mxu0
  %2047 = vmatprep.mubr.f32.mxu0 0.0
  %2048 = vmatmul.mubr.f32.gmra.mrb[0].mxu0 %v1726
  %v2049 = vpop.f32.mrb[0].mxu0
  %v2050 = vadd.f32 0.0, %v2049
  %v2051 = vpop.f32.mrb[0].mxu0
  %2052 = vmatprep.mubr.f32.mxu0 0.0
  %2053 = vmatmul.mubr.f32.gmra.mrb[0].mxu0 %v1729
  %v2054 = vpop.f32.mrb[0].mxu0
  %v2055 = vadd.f32 0.0, %v2054
  %v2056 = vpop.f32.mrb[0].mxu0
  %2057 = vmatprep.mubr.f32.mxu0 0.0
  %2058 = vmatmul.mubr.f32.gmra.mrb[0].mxu0 %v1732
  %v2059 = vpop.f32.mrb[0].mxu0
  %v2060 = vadd.f32 0.0, %v2059
  %v2061 = vpop.f32.mrb[0].mxu0
  %2062 = vmatprep.mubr.f32.mxu0 0.0
  %2063 = vmatmul.mubr.f32.gmra.mrb[0].mxu0 %v1735
  %v2064 = vpop.f32.mrb[0].mxu0
  %v2065 = vadd.f32 0.0, %v2064
  %v2066 = vpop.f32.mrb[0].mxu0
  %2067 = vmatprep.mubr.f32.mxu0 0.0
  %2068 = vmatmul.mubr.f32.gmra.mrb[0].mxu0 %v1738
  %v2069 = vpop.f32.mrb[0].mxu0
  %v2070 = vadd.f32 0.0, %v2069
  %v2071 = vpop.f32.mrb[0].mxu0
  %2072 = vdwg.mxu0
  %s2073 = scalar_lea.vmem %s2, 256
  %v2074 = vld [vmem:[%s2073] sm:$0xff]
  %v2075 = vld [vmem:[%s2073 + $0x8] sm:$0xff]
  %v2076 = vld [vmem:[%s2073 + $0x10] sm:$0xff]
  %v2077 = vld [vmem:[%s2073 + $0x18] sm:$0xff]
  %v2078 = vld [vmem:[%s2073 + $0x20] sm:$0xff]
  %v2079 = vld [vmem:[%s2073 + $0x28] sm:$0xff]
  %v2080 = vld [vmem:[%s2073 + $0x30] sm:$0xff]
  %v2081 = vld [vmem:[%s2073 + $0x38] sm:$0xff]
  %v2082 = vld [vmem:[%s2073 + $0x40] sm:$0xff]
  %v2083 = vld [vmem:[%s2073 + $0x48] sm:$0xff]
  %v2084 = vld [vmem:[%s2073 + $0x50] sm:$0xff]
  %v2085 = vld [vmem:[%s2073 + $0x58] sm:$0xff]
  %v2086 = vld [vmem:[%s2073 + $0x60] sm:$0xff]
  %v2087 = vld [vmem:[%s2073 + $0x68] sm:$0xff]
  %v2088 = vld [vmem:[%s2073 + $0x70] sm:$0xff]
  %v2089 = vld [vmem:[%s2073 + $0x78] sm:$0xff]
  %vm2090 = vmand %vm844, %vm1513
  %2092 = vset.pattern.permute.xlu0 0
  %2093 = vperm.xlu0 %2092, %v432
  %v2094 = vpop.permute.xlu0 %2093
  %2097 = vset.pattern.permute.xlu0 0
  %2098 = vperm.xlu0 %2097, %v437
  %v2099 = vpop.permute.xlu0 %2098
  %2102 = vset.pattern.permute.xlu0 0
  %2103 = vperm.xlu0 %2102, %v442
  %v2104 = vpop.permute.xlu0 %2103
  %2107 = vset.pattern.permute.xlu0 0
  %2108 = vperm.xlu0 %2107, %v447
  %v2109 = vpop.permute.xlu0 %2108
  %2112 = vset.pattern.permute.xlu0 0
  %2113 = vperm.xlu0 %2112, %v452
  %v2114 = vpop.permute.xlu0 %2113
  %2117 = vset.pattern.permute.xlu0 0
  %2118 = vperm.xlu0 %2117, %v457
  %v2119 = vpop.permute.xlu0 %2118
  %2122 = vset.pattern.permute.xlu0 0
  %2123 = vperm.xlu0 %2122, %v462
  %v2124 = vpop.permute.xlu0 %2123
  %2127 = vset.pattern.permute.xlu0 0
  %2128 = vperm.xlu0 %2127, %v467
  %v2129 = vpop.permute.xlu0 %2128
  %v2131 = vsel %vm2090, %v2094, 0.0
  %v2132 = vsel %vm2090, %v2099, 0.0
  %v2133 = vsel %vm2090, %v2104, 0.0
  %v2134 = vsel %vm2090, %v2109, 0.0
  %v2135 = vsel %vm2090, %v2114, 0.0
  %v2136 = vsel %vm2090, %v2119, 0.0
  %v2137 = vsel %vm2090, %v2124, 0.0
  %v2138 = vsel %vm2090, %v2129, 0.0
  %vm2139 = vcmp.ge.s32.totalorder %v843, 64
  %vm2140 = vcmp.lt.s32.totalorder %v843, 128
  %vm2141 = vmand %vm2139, %vm2140
  %2142 = vset.pattern.permute.xlu0 1
  %2143 = vperm.xlu0 %2142, %v432
  %v2144 = vpop.permute.xlu0 %2143
  %2146 = vset.pattern.permute.xlu0 1
  %2147 = vperm.xlu0 %2146, %v437
  %v2148 = vpop.permute.xlu0 %2147
  %2150 = vset.pattern.permute.xlu0 1
  %2151 = vperm.xlu0 %2150, %v442
  %v2152 = vpop.permute.xlu0 %2151
  %2154 = vset.pattern.permute.xlu0 1
  %2155 = vperm.xlu0 %2154, %v447
  %v2156 = vpop.permute.xlu0 %2155
  %2158 = vset.pattern.permute.xlu0 1
  %2159 = vperm.xlu0 %2158, %v452
  %v2160 = vpop.permute.xlu0 %2159
  %2162 = vset.pattern.permute.xlu0 1
  %2163 = vperm.xlu0 %2162, %v457
  %v2164 = vpop.permute.xlu0 %2163
  %2166 = vset.pattern.permute.xlu0 1
  %2167 = vperm.xlu0 %2166, %v462
  %v2168 = vpop.permute.xlu0 %2167
  %2170 = vset.pattern.permute.xlu0 1
  %2171 = vperm.xlu0 %2170, %v467
  %v2172 = vpop.permute.xlu0 %2171
  %v2174 = vsel %vm2141, %v2144, %v2131
  %v2175 = vsel %vm2141, %v2148, %v2132
  %v2176 = vsel %vm2141, %v2152, %v2133
  %v2177 = vsel %vm2141, %v2156, %v2134
  %v2178 = vsel %vm2141, %v2160, %v2135
  %v2179 = vsel %vm2141, %v2164, %v2136
  %v2180 = vsel %vm2141, %v2168, %v2137
  %v2181 = vsel %vm2141, %v2172, %v2138
  %v2183 = vsel %vm938, %v2075, 0
  %v2186 = vsel %vm938, %v2077, 0
  %v2189 = vsel %vm938, %v2079, 0
  %v2192 = vsel %vm938, %v2081, 0
  %v2195 = vsel %vm938, %v2083, 0
  %v2198 = vsel %vm938, %v2085, 0
  %v2201 = vsel %vm938, %v2087, 0
  %v2204 = vsel %vm938, %v2089, 0
  %2206 = vmatprep.subr.mxu0 0.0
  %2207 = vmatpush1.msra.mxu0 %v1807
  %2208 = vmatprep.subr.mxu0 0.0
  %2209 = vmatpush1.msra.mxu0 %v1812
  %2210 = vmatprep.subr.mxu0 0.0
  %2211 = vmatpush1.msra.mxu0 %v1817
  %2212 = vmatprep.subr.mxu0 0.0
  %2213 = vmatpush1.msra.mxu0 %v1822
  %2214 = vmatprep.subr.mxu0 0.0
  %2215 = vmatpush1.msra.mxu0 %v1827
  %2216 = vmatprep.subr.mxu0 0.0
  %2217 = vmatpush1.msra.mxu0 %v1832
  %2218 = vmatprep.subr.mxu0 0.0
  %2219 = vmatpush1.msra.mxu0 %v1837
  %2220 = vmatprep.subr.mxu0 0.0
  %2221 = vmatpush1.msra.mxu0 %v1842
  %2222 = vmatprep.subr.mxu0 0.0
  %2223 = vmatpush1.msra.mxu0 %v1921
  %2224 = vmatprep.subr.mxu0 0.0
  %2225 = vmatpush1.msra.mxu0 %v1926
  %2226 = vmatprep.subr.mxu0 0.0
  %2227 = vmatpush1.msra.mxu0 %v1931
  %2228 = vmatprep.subr.mxu0 0.0
  %2229 = vmatpush1.msra.mxu0 %v1936
  %2230 = vmatprep.subr.mxu0 0.0
  %2231 = vmatpush1.msra.mxu0 %v1941
  %2232 = vmatprep.subr.mxu0 0.0
  %2233 = vmatpush1.msra.mxu0 %v1946
  %2234 = vmatprep.subr.mxu0 0.0
  %2235 = vmatpush1.msra.mxu0 %v1951
  %2236 = vmatprep.subr.mxu0 0.0
  %2237 = vmatpush1.msra.mxu0 %v1956
  %2238 = vmatprep.subr.mxu0 0.0
  %2239 = vmatpush1.msra.mxu0 %v2035
  %2240 = vmatprep.subr.mxu0 0.0
  %2241 = vmatpush1.msra.mxu0 %v2040
  %2242 = vmatprep.subr.mxu0 0.0
  %2243 = vmatpush1.msra.mxu0 %v2045
  %2244 = vmatprep.subr.mxu0 0.0
  %2245 = vmatpush1.msra.mxu0 %v2050
  %2246 = vmatprep.subr.mxu0 0.0
  %2247 = vmatpush1.msra.mxu0 %v2055
  %2248 = vmatprep.subr.mxu0 0.0
  %2249 = vmatpush1.msra.mxu0 %v2060
  %2250 = vmatprep.subr.mxu0 0.0
  %2251 = vmatpush1.msra.mxu0 %v2065
  %2252 = vmatprep.subr.mxu0 0.0
  %2253 = vmatpush1.msra.mxu0 %v2070
  %2254 = vmatprep.subr.mxu0 0.0
  %2255 = vmatpush1.msra.mxu0 0.0
  %2256 = vmatprep.subr.mxu0 0.0
  %2257 = vmatpush1.msra.mxu0 0.0
  %2258 = vmatprep.subr.mxu0 0.0
  %2259 = vmatpush1.msra.mxu0 0.0
  %2260 = vmatprep.subr.mxu0 0.0
  %2261 = vmatpush1.msra.mxu0 0.0
  %2262 = vmatprep.subr.mxu0 0.0
  %2263 = vmatpush1.msra.mxu0 0.0
  %2264 = vmatprep.subr.mxu0 0.0
  %2265 = vmatpush1.msra.mxu0 0.0
  %2266 = vmatprep.subr.mxu0 0.0
  %2267 = vmatpush1.msra.mxu0 0.0
  %2268 = vmatprep.subr.mxu0 0.0
  %2269 = vmatpush1.msra.mxu0 0.0
  %2270 = vmatprep.mubr.f32.mxu0 %v2183
  %2271 = vmatmul.mubr.f32.gmra.mrb[0].mxu0 %v2074
  %v2272 = vpop.f32.mrb[0].mxu0
  %v2273 = vadd.f32 %v2174, %v2272
  %v2274 = vpop.f32.mrb[0].mxu0
  %2275 = vmatprep.mubr.f32.mxu0 %v2186
  %2276 = vmatmul.mubr.f32.gmra.mrb[0].mxu0 %v2076
  %v2277 = vpop.f32.mrb[0].mxu0
  %v2278 = vadd.f32 %v2175, %v2277
  %v2279 = vpop.f32.mrb[0].mxu0
  %2280 = vmatprep.mubr.f32.mxu0 %v2189
  %2281 = vmatmul.mubr.f32.gmra.mrb[0].mxu0 %v2078
  %v2282 = vpop.f32.mrb[0].mxu0
  %v2283 = vadd.f32 %v2176, %v2282
  %v2284 = vpop.f32.mrb[0].mxu0
  %2285 = vmatprep.mubr.f32.mxu0 %v2192
  %2286 = vmatmul.mubr.f32.gmra.mrb[0].mxu0 %v2080
  %v2287 = vpop.f32.mrb[0].mxu0
  %v2288 = vadd.f32 %v2177, %v2287
  %v2289 = vpop.f32.mrb[0].mxu0
  %2290 = vmatprep.mubr.f32.mxu0 %v2195
  %2291 = vmatmul.mubr.f32.gmra.mrb[0].mxu0 %v2082
  %v2292 = vpop.f32.mrb[0].mxu0
  %v2293 = vadd.f32 %v2178, %v2292
  %v2294 = vpop.f32.mrb[0].mxu0
  %2295 = vmatprep.mubr.f32.mxu0 %v2198
  %2296 = vmatmul.mubr.f32.gmra.mrb[0].mxu0 %v2084
  %v2297 = vpop.f32.mrb[0].mxu0
  %v2298 = vadd.f32 %v2179, %v2297
  %v2299 = vpop.f32.mrb[0].mxu0
  %2300 = vmatprep.mubr.f32.mxu0 %v2201
  %2301 = vmatmul.mubr.f32.gmra.mrb[0].mxu0 %v2086
  %v2302 = vpop.f32.mrb[0].mxu0
  %v2303 = vadd.f32 %v2180, %v2302
  %v2304 = vpop.f32.mrb[0].mxu0
  %2305 = vmatprep.mubr.f32.mxu0 %v2204
  %2306 = vmatmul.mubr.f32.gmra.mrb[0].mxu0 %v2088
  %v2307 = vpop.f32.mrb[0].mxu0
  %v2308 = vadd.f32 %v2181, %v2307
  %v2309 = vpop.f32.mrb[0].mxu0
  %2310 = vdwg.mxu0
  %v2311 = vld [vmem:[%s8] sm:$0xff]
  %v2312 = vld [vmem:[%s8 + $0x8] sm:$0xff]
  %v2313 = vld [vmem:[%s8 + $0x10] sm:$0xff]
  %v2314 = vld [vmem:[%s8 + $0x18] sm:$0xff]
  %v2315 = vld [vmem:[%s8 + $0x20] sm:$0xff]
  %v2316 = vld [vmem:[%s8 + $0x28] sm:$0xff]
  %v2317 = vld [vmem:[%s8 + $0x30] sm:$0xff]
  %v2318 = vld [vmem:[%s8 + $0x38] sm:$0xff]
  %s2319 = scalar_lea.vmem %s8, 64
  %v2320 = vld [vmem:[%s2319] sm:$0xff]
  %v2321 = vld [vmem:[%s2319 + $0x8] sm:$0xff]
  %v2322 = vld [vmem:[%s2319 + $0x10] sm:$0xff]
  %v2323 = vld [vmem:[%s2319 + $0x18] sm:$0xff]
  %v2324 = vld [vmem:[%s2319 + $0x20] sm:$0xff]
  %v2325 = vld [vmem:[%s2319 + $0x28] sm:$0xff]
  %v2326 = vld [vmem:[%s2319 + $0x30] sm:$0xff]
  %v2327 = vld [vmem:[%s2319 + $0x38] sm:$0xff]
  %s2328 = scalar_lea.vmem %s8, 128
  %v2329 = vld [vmem:[%s2328] sm:$0xff]
  %v2330 = vld [vmem:[%s2328 + $0x8] sm:$0xff]
  %v2331 = vld [vmem:[%s2328 + $0x10] sm:$0xff]
  %v2332 = vld [vmem:[%s2328 + $0x18] sm:$0xff]
  %v2333 = vld [vmem:[%s2328 + $0x20] sm:$0xff]
  %v2334 = vld [vmem:[%s2328 + $0x28] sm:$0xff]
  %v2335 = vld [vmem:[%s2328 + $0x30] sm:$0xff]
  %v2336 = vld [vmem:[%s2328 + $0x38] sm:$0xff]
  %2338 = vset.pattern.permute.xlu0 0
  %2339 = vperm.xlu0 %2338, %v2311
  %v2340 = vpop.permute.xlu0 %2339
  %2343 = vset.pattern.permute.xlu0 0
  %2344 = vperm.xlu0 %2343, %v2312
  %v2345 = vpop.permute.xlu0 %2344
  %2348 = vset.pattern.permute.xlu0 0
  %2349 = vperm.xlu0 %2348, %v2313
  %v2350 = vpop.permute.xlu0 %2349
  %2353 = vset.pattern.permute.xlu0 0
  %2354 = vperm.xlu0 %2353, %v2314
  %v2355 = vpop.permute.xlu0 %2354
  %2358 = vset.pattern.permute.xlu0 0
  %2359 = vperm.xlu0 %2358, %v2315
  %v2360 = vpop.permute.xlu0 %2359
  %2363 = vset.pattern.permute.xlu0 0
  %2364 = vperm.xlu0 %2363, %v2316
  %v2365 = vpop.permute.xlu0 %2364
  %2368 = vset.pattern.permute.xlu0 0
  %2369 = vperm.xlu0 %2368, %v2317
  %v2370 = vpop.permute.xlu0 %2369
  %2373 = vset.pattern.permute.xlu0 0
  %2374 = vperm.xlu0 %2373, %v2318
  %v2375 = vpop.permute.xlu0 %2374
  %v2377 = vmul.f32 %v2273, %v2340
  %v2378 = vmul.f32 %v2278, %v2345
  %v2379 = vmul.f32 %v2283, %v2350
  %v2380 = vmul.f32 %v2288, %v2355
  %v2381 = vmul.f32 %v2293, %v2360
  %v2382 = vmul.f32 %v2298, %v2365
  %v2383 = vmul.f32 %v2303, %v2370
  %v2384 = vmul.f32 %v2308, %v2375
  %2386 = vset.pattern.permute.xlu0 0
  %2387 = vperm.xlu0 %2386, %v2320
  %v2388 = vpop.permute.xlu0 %2387
  %2391 = vset.pattern.permute.xlu0 0
  %2392 = vperm.xlu0 %2391, %v2321
  %v2393 = vpop.permute.xlu0 %2392
  %2396 = vset.pattern.permute.xlu0 0
  %2397 = vperm.xlu0 %2396, %v2322
  %v2398 = vpop.permute.xlu0 %2397
  %2401 = vset.pattern.permute.xlu0 0
  %2402 = vperm.xlu0 %2401, %v2323
  %v2403 = vpop.permute.xlu0 %2402
  %2406 = vset.pattern.permute.xlu0 0
  %2407 = vperm.xlu0 %2406, %v2324
  %v2408 = vpop.permute.xlu0 %2407
  %2411 = vset.pattern.permute.xlu0 0
  %2412 = vperm.xlu0 %2411, %v2325
  %v2413 = vpop.permute.xlu0 %2412
  %2416 = vset.pattern.permute.xlu0 0
  %2417 = vperm.xlu0 %2416, %v2326
  %v2418 = vpop.permute.xlu0 %2417
  %2421 = vset.pattern.permute.xlu0 0
  %2422 = vperm.xlu0 %2421, %v2327
  %v2423 = vpop.permute.xlu0 %2422
  %v2425 = vadd.f32 %v2377, %v2388
  %v2426 = vadd.f32 %v2378, %v2393
  %v2427 = vadd.f32 %v2379, %v2398
  %v2428 = vadd.f32 %v2380, %v2403
  %v2429 = vadd.f32 %v2381, %v2408
  %v2430 = vadd.f32 %v2382, %v2413
  %v2431 = vadd.f32 %v2383, %v2418
  %v2432 = vadd.f32 %v2384, %v2423
  %v2433 = vld [vmem:[%s9] sm:$0xff]
  %v2434 = vld [vmem:[%s9 + $0x8] sm:$0xff]
  %v2435 = vld [vmem:[%s9 + $0x10] sm:$0xff]
  %v2436 = vld [vmem:[%s9 + $0x18] sm:$0xff]
  %v2437 = vld [vmem:[%s9 + $0x20] sm:$0xff]
  %v2438 = vld [vmem:[%s9 + $0x28] sm:$0xff]
  %v2439 = vld [vmem:[%s9 + $0x30] sm:$0xff]
  %v2440 = vld [vmem:[%s9 + $0x38] sm:$0xff]
  %v2441 = vmul.f32 %v2425, %v2425
  %v2442 = vmul.f32 %v2426, %v2426
  %v2443 = vmul.f32 %v2427, %v2427
  %v2444 = vmul.f32 %v2428, %v2428
  %v2445 = vmul.f32 %v2429, %v2429
  %v2446 = vmul.f32 %v2430, %v2430
  %v2447 = vmul.f32 %v2431, %v2431
  %v2448 = vmul.f32 %v2432, %v2432
  %v2450 = vsel %vm938, %v2433, 0
  %v2453 = vsel %vm938, %v2434, 0
  %v2456 = vsel %vm938, %v2435, 0
  %v2459 = vsel %vm938, %v2436, 0
  %v2462 = vsel %vm938, %v2437, 0
  %v2465 = vsel %vm938, %v2438, 0
  %v2468 = vsel %vm938, %v2439, 0
  %v2471 = vsel %vm938, %v2440, 0
  %2473 = vmatprep.subr.mxu0 0.0
  %2474 = vmatpush1.msra.mxu0 %v2441
  %2475 = vmatprep.subr.mxu0 0.0
  %2476 = vmatpush1.msra.mxu0 %v2442
  %2477 = vmatprep.subr.mxu0 0.0
  %2478 = vmatpush1.msra.mxu0 %v2443
  %2479 = vmatprep.subr.mxu0 0.0
  %2480 = vmatpush1.msra.mxu0 %v2444
  %2481 = vmatprep.subr.mxu0 0.0
  %2482 = vmatpush1.msra.mxu0 %v2445
  %2483 = vmatprep.subr.mxu0 0.0
  %2484 = vmatpush1.msra.mxu0 %v2446
  %2485 = vmatprep.subr.mxu0 0.0
  %2486 = vmatpush1.msra.mxu0 %v2447
  %2487 = vmatprep.subr.mxu0 0.0
  %2488 = vmatpush1.msra.mxu0 %v2448
  %2489 = vmatprep.subr.mxu0 0.0
  %2490 = vmatpush1.msra.mxu0 0.0
  %2491 = vmatprep.subr.mxu0 0.0
  %2492 = vmatpush1.msra.mxu0 0.0
  %2493 = vmatprep.subr.mxu0 0.0
  %2494 = vmatpush1.msra.mxu0 0.0
  %2495 = vmatprep.subr.mxu0 0.0
  %2496 = vmatpush1.msra.mxu0 0.0
  %2497 = vmatprep.subr.mxu0 0.0
  %2498 = vmatpush1.msra.mxu0 0.0
  %2499 = vmatprep.subr.mxu0 0.0
  %2500 = vmatpush1.msra.mxu0 0.0
  %2501 = vmatprep.subr.mxu0 0.0
  %2502 = vmatpush1.msra.mxu0 0.0
  %2503 = vmatprep.subr.mxu0 0.0
  %2504 = vmatpush1.msra.mxu0 0.0
  %2505 = vmatprep.subr.mxu0 0.0
  %2506 = vmatpush1.msra.mxu0 0.0
  %2507 = vmatprep.subr.mxu0 0.0
  %2508 = vmatpush1.msra.mxu0 0.0
  %2509 = vmatprep.subr.mxu0 0.0
  %2510 = vmatpush1.msra.mxu0 0.0
  %2511 = vmatprep.subr.mxu0 0.0
  %2512 = vmatpush1.msra.mxu0 0.0
  %2513 = vmatprep.subr.mxu0 0.0
  %2514 = vmatpush1.msra.mxu0 0.0
  %2515 = vmatprep.subr.mxu0 0.0
  %2516 = vmatpush1.msra.mxu0 0.0
  %2517 = vmatprep.subr.mxu0 0.0
  %2518 = vmatpush1.msra.mxu0 0.0
  %2519 = vmatprep.subr.mxu0 0.0
  %2520 = vmatpush1.msra.mxu0 0.0
  %2521 = vmatprep.subr.mxu0 0.0
  %2522 = vmatpush1.msra.mxu0 0.0
  %2523 = vmatprep.subr.mxu0 0.0
  %2524 = vmatpush1.msra.mxu0 0.0
  %2525 = vmatprep.subr.mxu0 0.0
  %2526 = vmatpush1.msra.mxu0 0.0
  %2527 = vmatprep.subr.mxu0 0.0
  %2528 = vmatpush1.msra.mxu0 0.0
  %2529 = vmatprep.subr.mxu0 0.0
  %2530 = vmatpush1.msra.mxu0 0.0
  %2531 = vmatprep.subr.mxu0 0.0
  %2532 = vmatpush1.msra.mxu0 0.0
  %2533 = vmatprep.subr.mxu0 0.0
  %2534 = vmatpush1.msra.mxu0 0.0
  %2535 = vmatprep.subr.mxu0 0.0
  %2536 = vmatpush1.msra.mxu0 0.0
  %2537 = vmatprep.mubr.f32.mxu0 0.0
  %2538 = vmatmul.mubr.f32.gmra.mrb[0].mxu0 %v2450
  %v2539 = vpop.f32.mrb[0].mxu0
  %v2540 = vadd.f32 0.0, %v2539
  %v2541 = vpop.f32.mrb[0].mxu0
  %2542 = vmatprep.mubr.f32.mxu0 0.0
  %2543 = vmatmul.mubr.f32.gmra.mrb[0].mxu0 %v2453
  %v2544 = vpop.f32.mrb[0].mxu0
  %v2545 = vadd.f32 0.0, %v2544
  %v2546 = vpop.f32.mrb[0].mxu0
  %2547 = vmatprep.mubr.f32.mxu0 0.0
  %2548 = vmatmul.mubr.f32.gmra.mrb[0].mxu0 %v2456
  %v2549 = vpop.f32.mrb[0].mxu0
  %v2550 = vadd.f32 0.0, %v2549
  %v2551 = vpop.f32.mrb[0].mxu0
  %2552 = vmatprep.mubr.f32.mxu0 0.0
  %2553 = vmatmul.mubr.f32.gmra.mrb[0].mxu0 %v2459
  %v2554 = vpop.f32.mrb[0].mxu0
  %v2555 = vadd.f32 0.0, %v2554
  %v2556 = vpop.f32.mrb[0].mxu0
  %2557 = vmatprep.mubr.f32.mxu0 0.0
  %2558 = vmatmul.mubr.f32.gmra.mrb[0].mxu0 %v2462
  %v2559 = vpop.f32.mrb[0].mxu0
  %v2560 = vadd.f32 0.0, %v2559
  %v2561 = vpop.f32.mrb[0].mxu0
  %2562 = vmatprep.mubr.f32.mxu0 0.0
  %2563 = vmatmul.mubr.f32.gmra.mrb[0].mxu0 %v2465
  %v2564 = vpop.f32.mrb[0].mxu0
  %v2565 = vadd.f32 0.0, %v2564
  %v2566 = vpop.f32.mrb[0].mxu0
  %2567 = vmatprep.mubr.f32.mxu0 0.0
  %2568 = vmatmul.mubr.f32.gmra.mrb[0].mxu0 %v2468
  %v2569 = vpop.f32.mrb[0].mxu0
  %v2570 = vadd.f32 0.0, %v2569
  %v2571 = vpop.f32.mrb[0].mxu0
  %2572 = vmatprep.mubr.f32.mxu0 0.0
  %2573 = vmatmul.mubr.f32.gmra.mrb[0].mxu0 %v2471
  %v2574 = vpop.f32.mrb[0].mxu0
  %v2575 = vadd.f32 0.0, %v2574
  %v2576 = vpop.f32.mrb[0].mxu0
  %2577 = vdwg.mxu0
  %v2578 = vmax.f32 %v2540, 1e-12
  %v2579 = vmax.f32 %v2545, 1e-12
  %v2580 = vmax.f32 %v2550, 1e-12
  %v2581 = vmax.f32 %v2555, 1e-12
  %v2582 = vmax.f32 %v2560, 1e-12
  %v2583 = vmax.f32 %v2565, 1e-12
  %v2584 = vmax.f32 %v2570, 1e-12
  %v2585 = vmax.f32 %v2575, 1e-12
  %v2586 = vrsqrt.pop %v2578
  %v2587 = vrsqrt.pop %v2579
  %v2588 = vrsqrt.pop %v2580
  %v2589 = vrsqrt.pop %v2581
  %v2590 = vrsqrt.pop %v2582
  %v2591 = vrsqrt.pop %v2583
  %v2592 = vrsqrt.pop %v2584
  %v2593 = vrsqrt.pop %v2585
  %v2594 = vmul.f32 %v2425, %v2586
  %v2595 = vmul.f32 %v2426, %v2587
  %v2596 = vmul.f32 %v2427, %v2588
  %v2597 = vmul.f32 %v2428, %v2589
  %v2598 = vmul.f32 %v2429, %v2590
  %v2599 = vmul.f32 %v2430, %v2591
  %v2600 = vmul.f32 %v2431, %v2592
  %v2601 = vmul.f32 %v2432, %v2593
  %v2602 = vsub.f32 %v2594, %v2388
  %v2603 = vsub.f32 %v2595, %v2393
  %v2604 = vsub.f32 %v2596, %v2398
  %v2605 = vsub.f32 %v2597, %v2403
  %v2606 = vsub.f32 %v2598, %v2408
  %v2607 = vsub.f32 %v2599, %v2413
  %v2608 = vsub.f32 %v2600, %v2418
  %v2609 = vsub.f32 %v2601, %v2423
  %2611 = vset.pattern.permute.xlu0 0
  %2612 = vperm.xlu0 %2611, %v2329
  %v2613 = vpop.permute.xlu0 %2612
  %2616 = vset.pattern.permute.xlu0 0
  %2617 = vperm.xlu0 %2616, %v2330
  %v2618 = vpop.permute.xlu0 %2617
  %2621 = vset.pattern.permute.xlu0 0
  %2622 = vperm.xlu0 %2621, %v2331
  %v2623 = vpop.permute.xlu0 %2622
  %2626 = vset.pattern.permute.xlu0 0
  %2627 = vperm.xlu0 %2626, %v2332
  %v2628 = vpop.permute.xlu0 %2627
  %2631 = vset.pattern.permute.xlu0 0
  %2632 = vperm.xlu0 %2631, %v2333
  %v2633 = vpop.permute.xlu0 %2632
  %2636 = vset.pattern.permute.xlu0 0
  %2637 = vperm.xlu0 %2636, %v2334
  %v2638 = vpop.permute.xlu0 %2637
  %2641 = vset.pattern.permute.xlu0 0
  %2642 = vperm.xlu0 %2641, %v2335
  %v2643 = vpop.permute.xlu0 %2642
  %2646 = vset.pattern.permute.xlu0 0
  %2647 = vperm.xlu0 %2646, %v2336
  %v2648 = vpop.permute.xlu0 %2647
  %v2650 = vmul.f32 %v2602, %v2613
  %v2651 = vmul.f32 %v2603, %v2618
  %v2652 = vmul.f32 %v2604, %v2623
  %v2653 = vmul.f32 %v2605, %v2628
  %v2654 = vmul.f32 %v2606, %v2633
  %v2655 = vmul.f32 %v2607, %v2638
  %v2656 = vmul.f32 %v2608, %v2643
  %v2657 = vmul.f32 %v2609, %v2648
  %2658 = vst [vmem:[%s10] sm:$0xff] %v2650
  %2659 = vst [vmem:[%s10 + $0x8] sm:$0xff] %v2651
  %2660 = vst [vmem:[%s10 + $0x10] sm:$0xff] %v2652
  %2661 = vst [vmem:[%s10 + $0x18] sm:$0xff] %v2653
  %2662 = vst [vmem:[%s10 + $0x20] sm:$0xff] %v2654
  %2663 = vst [vmem:[%s10 + $0x28] sm:$0xff] %v2655
  %2664 = vst [vmem:[%s10 + $0x30] sm:$0xff] %v2656
  %2665 = vst [vmem:[%s10 + $0x38] sm:$0xff] %v2657
  // Predicated region
  $region42: #{decoder_forward.1} parent=0 // pred_check
    _
  $region43: #{decoder_forward.1} parent=0 // pred_check_branch
    %2667 = sbr.rel (0) target = $region45
  $region44: #{decoder_forward.1} parent=0 // pred_region
    _
  $region45: #{decoder_forward.1} parent=0 // pred_fallthru
    _
  // Predicated region
  $region46: #{decoder_forward.1} parent=0 // pred_check
    _
  $region47: #{decoder_forward.1} parent=0 // pred_check_branch
    %2669 = sbr.rel (0) target = $region49
  $region48: #{decoder_forward.1} parent=0 // pred_region
    _
  $region49: #{decoder_forward.1} parent=0 // pred_fallthru
    _

</llo_original>
